<compile_context>
chip_gen: v6e
topology: v6e:2x2x1
jax: 0.10.0
libtpu: 0.0.40
codegen_flags: <defaults>
</compile_context>

<pallas_src>
import math

import jax
import jax.numpy as jnp
from jax.experimental import pallas as pl
from jax.experimental.pallas import tpu as pltpu

_EPS = 1e-12  # matches torch.nn.functional.normalize default eps


def _round_up(x, m):
    return (x + m - 1) // m * m


def _subcenter_kernel(x_ref, w_ref, ix_ref, iw_ref, o_ref):
    # x_ref : (TM, D)      raw features (bf16 or f32)
    # w_ref : (K, D, TN)   raw sub-center weights, contraction dim second
    # ix_ref: (TM, 1)      f32  1 / max(||x_row||, eps)
    # iw_ref: (K, 1, TN)   f32  1 / max(||w_row||, eps) per sub-center column
    # o_ref : (TM, TN)     f32  max-over-k cosine
    x = x_ref[...]
    k = w_ref.shape[0]
    cos = None
    for j in range(k):  # static unroll: one MXU matmul per sub-center
        c = jnp.dot(x, w_ref[j], preferred_element_type=jnp.float32)  # (TM, TN)
        c = c * iw_ref[j]                    # scale by weight inv-norms (VPU)
        cos = c if cos is None else jnp.maximum(cos, c)
    o_ref[...] = (cos * ix_ref[...]).astype(o_ref.dtype)


def arc_margin_subcenter(features, weight, out_features, k,
                         *, compute_dtype=jnp.bfloat16):
    """features: (B, in_features); weight: (out_features*k, in_features)."""
    b, d = features.shape
    assert weight.shape == (out_features * k, d)

    x = features.astype(jnp.float32)
    w = weight.astype(jnp.float32)

    # Hoisted inverse L2 norms: rsqrt(max(sum_sq, eps^2)) == 1/max(||.||, eps).
    inv_x = jax.lax.rsqrt(
        jnp.maximum(jnp.sum(x * x, axis=-1, keepdims=True), _EPS * _EPS))     # (B, 1)
    inv_w_rows = jax.lax.rsqrt(
        jnp.maximum(jnp.sum(w * w, axis=-1), _EPS * _EPS))                    # (O*k,)

    # weight row o*k + j  ->  wk[j, :, o]  (contract D directly, no in-kernel .T)
    wk = w.reshape(out_features, k, d).transpose(1, 2, 0)                     # (k, D, O)
    iw = inv_w_rows.reshape(out_features, k).transpose(1, 0)                  # (k, O)
    iw = iw.reshape(k, 1, out_features)

    # ---- tile sizes (lane/sublane dense, VMEM-budgeted) --------------------
    itemsize = jnp.dtype(compute_dtype).itemsize
    d_pad = _round_up(d, 128)
    tm = min(128, _round_up(b, 8))
    tn = min(512, _round_up(out_features, 128))
    # keep the double-buffered weight block well under v7x's 64 MiB VMEM
    while tn > 128 and 2 * k * d_pad * tn * itemsize > 24 * 1024 * 1024:
        tn -= 128
    b_pad = _round_up(b, tm)
    o_pad = _round_up(out_features, tn)
    # TODO(synk): for very large in_features, add a third "arbitrary" grid axis
    # over D with (TM, TN) f32 accumulators in VMEM scratch instead of whole-D blocks.

    # ---- zero-pad operands (padded rows/cols -> exact zero outputs) -------
    x_p = jnp.pad(x.astype(compute_dtype), ((0, b_pad - b), (0, d_pad - d)))
    w_p = jnp.pad(wk.astype(compute_dtype),
                  ((0, 0), (0, d_pad - d), (0, o_pad - out_features)))
    ix_p = jnp.pad(inv_x, ((0, b_pad - b), (0, 0)))
    iw_p = jnp.pad(iw, ((0, 0), (0, 0), (0, o_pad - out_features)))

    # double-buffered per-step footprint -> explicit VMEM limit with headroom
    block_bytes = (2 * tm * d_pad * itemsize            # features
                   + 2 * k * d_pad * tn * itemsize      # weights
                   + 2 * (tm + k * tn) * 4              # inverse norms
                   + 2 * tm * tn * 4)                   # output
    vmem_limit = int(min(max(2 * block_bytes, 4 * 1024 * 1024),
                         48 * 1024 * 1024))

    out = pl.pallas_call(
        _subcenter_kernel,
        out_shape=jax.ShapeDtypeStruct((b_pad, o_pad), jnp.float32),
        grid_spec=pltpu.PrefetchScalarGridSpec(
            num_scalar_prefetch=0,
            grid=(b_pad // tm, o_pad // tn),
            in_specs=[
                pl.BlockSpec((tm, d_pad), lambda i, j: (i, 0)),
                pl.BlockSpec((k, d_pad, tn), lambda i, j: (0, 0, j)),
                pl.BlockSpec((tm, 1), lambda i, j: (i, 0)),
                pl.BlockSpec((k, 1, tn), lambda i, j: (0, 0, j)),
            ],
            out_specs=pl.BlockSpec((tm, tn), lambda i, j: (i, j)),
        ),
        compiler_params=pltpu.CompilerParams(
            dimension_semantics=("parallel", "parallel"),
            vmem_limit_bytes=vmem_limit,
        ),
    )(x_p, w_p, ix_p, iw_p)

    return out[:b, :out_features]


def _reference(features, weight, out_features, k):
    xn = features / jnp.maximum(
        jnp.linalg.norm(features, axis=-1, keepdims=True), _EPS)
    wn = weight / jnp.maximum(
        jnp.linalg.norm(weight, axis=-1, keepdims=True), _EPS)
    cosine_all = (xn @ wn.T).reshape(-1, out_features, k)
    return jnp.max(cosine_all, axis=2)


if __name__ == "__main__":
    # Small but grid-exercising shapes: pads B (136->256 with TM=128 when large,
    # here 136->136 w/ TM chosen accordingly), O (700->1024), D (64->128).
    B, IN_FEATURES, OUT_FEATURES, K = 136, 64, 700, 3

    key = jax.random.PRNGKey(0)
    k_feat, k_w = jax.random.split(key)

    features = jax.random.normal(k_feat, (B, IN_FEATURES), dtype=jnp.float32)

    # reset_parameters(): U(-stdv, stdv), stdv = 1/sqrt(in_features)
    stdv = 1.0 / math.sqrt(IN_FEATURES)
    weight = jax.random.uniform(
        k_w, (OUT_FEATURES * K, IN_FEATURES), dtype=jnp.float32,
        minval=-stdv, maxval=stdv)

    ref = _reference(features, weight, OUT_FEATURES, K)

    # Production path: bf16 MXU operands, f32 accumulation + f32 norm/scale math.
    out_bf16 = jax.block_until_ready(
        arc_margin_subcenter(features, weight, OUT_FEATURES, K,
                             compute_dtype=jnp.bfloat16))
    assert out_bf16.shape == (B, OUT_FEATURES)
    assert jnp.allclose(out_bf16, ref, atol=1.5e-2, rtol=1e-2), (
        float(jnp.max(jnp.abs(out_bf16 - ref))))

    # f32 path: tighter check of the tiling / padding / max-over-k / scaling structure.
    out_f32 = jax.block_until_ready(
        arc_margin_subcenter(features, weight, OUT_FEATURES, K,
                             compute_dtype=jnp.float32))
    assert jnp.allclose(out_f32, ref, atol=1e-4, rtol=1e-4), (
        float(jnp.max(jnp.abs(out_f32 - ref))))

    print("KERNEL_OK")
</pallas_src>

<mosaic_0001>
module attributes {stable_mosaic.version = 11 : i64} {
  func.func @_subcenter_kernel(%arg0: i32, %arg1: i32, %arg2: memref<128x128xbf16, #tpu.memory_space<vmem>>, %arg3: memref<3x128x512xbf16, #tpu.memory_space<vmem>>, %arg4: memref<128x1xf32, #tpu.memory_space<vmem>>, %arg5: memref<3x1x512xf32, #tpu.memory_space<vmem>>, %arg6: memref<128x512xf32, #tpu.memory_space<vmem>>) attributes {dimension_semantics = [#tpu.dimension_semantics<parallel>, #tpu.dimension_semantics<parallel>], iteration_bounds = array<i64: 2, 2>, scalar_prefetch = 0 : i64, scratch_operands = 0 : i64, tpu.core_type = #tpu.core_type<tc>, window_params = [{transform_indices = @transform_0, window_bounds = array<i64: 128, 128>}, {transform_indices = @transform_1, window_bounds = array<i64: 3, 128, 512>}, {transform_indices = @transform_2, window_bounds = array<i64: 128, 1>}, {transform_indices = @transform_3, window_bounds = array<i64: 3, 1, 512>}, {transform_indices = @transform_4, window_bounds = array<i64: 128, 512>}]} {
    %c0 = arith.constant 0 : index
    %c0_0 = arith.constant 0 : index
    %0 = vector.load %arg2[%c0, %c0_0] : memref<128x128xbf16, #tpu.memory_space<vmem>>, vector<128x128xbf16>
    %c0_1 = arith.constant 0 : index
    %c0_2 = arith.constant 0 : index
    %c0_3 = arith.constant 0 : index
    %1 = vector.load %arg3[%c0_1, %c0_2, %c0_3] : memref<3x128x512xbf16, #tpu.memory_space<vmem>>, vector<1x128x512xbf16>
    %2 = vector.shape_cast %1 : vector<1x128x512xbf16> to vector<128x512xbf16>
    %cst = arith.constant dense<0.000000e+00> : vector<128x512xf32>
    %3 = tpu.matmul %0, %2, %cst {dimension_numbers = #tpu.dot_dimension_numbers<[1], [0], [0], [1], [0, 0, 1, 1], [], []>} : vector<128x128xbf16>, vector<128x512xbf16>, vector<128x512xf32> -> vector<128x512xf32>
    %c0_4 = arith.constant 0 : index
    %c0_5 = arith.constant 0 : index
    %c0_6 = arith.constant 0 : index
    %4 = vector.load %arg5[%c0_4, %c0_5, %c0_6] : memref<3x1x512xf32, #tpu.memory_space<vmem>>, vector<1x1x512xf32>
    %5 = vector.shape_cast %4 : vector<1x1x512xf32> to vector<1x512xf32>
    %6 = vector.broadcast %5 : vector<1x512xf32> to vector<128x512xf32>
    %7 = arith.mulf %3, %6 : vector<128x512xf32>
    %c1 = arith.constant 1 : index
    %c0_7 = arith.constant 0 : index
    %c0_8 = arith.constant 0 : index
    %8 = vector.load %arg3[%c1, %c0_7, %c0_8] : memref<3x128x512xbf16, #tpu.memory_space<vmem>>, vector<1x128x512xbf16>
    %9 = vector.shape_cast %8 : vector<1x128x512xbf16> to vector<128x512xbf16>
    %cst_9 = arith.constant dense<0.000000e+00> : vector<128x512xf32>
    %10 = tpu.matmul %0, %9, %cst_9 {dimension_numbers = #tpu.dot_dimension_numbers<[1], [0], [0], [1], [0, 0, 1, 1], [], []>} : vector<128x128xbf16>, vector<128x512xbf16>, vector<128x512xf32> -> vector<128x512xf32>
    %c1_10 = arith.constant 1 : index
    %c0_11 = arith.constant 0 : index
    %c0_12 = arith.constant 0 : index
    %11 = vector.load %arg5[%c1_10, %c0_11, %c0_12] : memref<3x1x512xf32, #tpu.memory_space<vmem>>, vector<1x1x512xf32>
    %12 = vector.shape_cast %11 : vector<1x1x512xf32> to vector<1x512xf32>
    %13 = vector.broadcast %12 : vector<1x512xf32> to vector<128x512xf32>
    %14 = arith.mulf %10, %13 : vector<128x512xf32>
    %15 = arith.maximumf %7, %14 : vector<128x512xf32>
    %c2 = arith.constant 2 : index
    %c0_13 = arith.constant 0 : index
    %c0_14 = arith.constant 0 : index
    %16 = vector.load %arg3[%c2, %c0_13, %c0_14] : memref<3x128x512xbf16, #tpu.memory_space<vmem>>, vector<1x128x512xbf16>
    %17 = vector.shape_cast %16 : vector<1x128x512xbf16> to vector<128x512xbf16>
    %cst_15 = arith.constant dense<0.000000e+00> : vector<128x512xf32>
    %18 = tpu.matmul %0, %17, %cst_15 {dimension_numbers = #tpu.dot_dimension_numbers<[1], [0], [0], [1], [0, 0, 1, 1], [], []>} : vector<128x128xbf16>, vector<128x512xbf16>, vector<128x512xf32> -> vector<128x512xf32>
    %c2_16 = arith.constant 2 : index
    %c0_17 = arith.constant 0 : index
    %c0_18 = arith.constant 0 : index
    %19 = vector.load %arg5[%c2_16, %c0_17, %c0_18] : memref<3x1x512xf32, #tpu.memory_space<vmem>>, vector<1x1x512xf32>
    %20 = vector.shape_cast %19 : vector<1x1x512xf32> to vector<1x512xf32>
    %21 = vector.broadcast %20 : vector<1x512xf32> to vector<128x512xf32>
    %22 = arith.mulf %18, %21 : vector<128x512xf32>
    %23 = arith.maximumf %15, %22 : vector<128x512xf32>
    %c0_19 = arith.constant 0 : index
    %c0_20 = arith.constant 0 : index
    %24 = vector.load %arg4[%c0_19, %c0_20] : memref<128x1xf32, #tpu.memory_space<vmem>>, vector<128x1xf32>
    %25 = vector.broadcast %24 : vector<128x1xf32> to vector<128x512xf32>
    %26 = arith.mulf %23, %25 : vector<128x512xf32>
    %c0_21 = arith.constant 0 : index
    %c0_22 = arith.constant 0 : index
    %27 = vector.load %arg6[%c0_21, %c0_22] : memref<128x512xf32, #tpu.memory_space<vmem>>, vector<128x512xf32>
    tpu.vector_store %arg6[%c0_21, %c0_22], %26 {strides = array<i32>} : memref<128x512xf32, #tpu.memory_space<vmem>>, vector<128x512xf32>,
    return
  }
  func.func @transform_0(%arg0: i32, %arg1: i32) -> (i32, i32) {
    %c0_i32 = arith.constant 0 : i32
    %c0_i32_0 = arith.constant 0 : i32
    return %arg0, %c0_i32 : i32, i32
  }
  func.func @transform_1(%arg0: i32, %arg1: i32) -> (i32, i32, i32) {
    %c0_i32 = arith.constant 0 : i32
    %c0_i32_0 = arith.constant 0 : i32
    %c0_i32_1 = arith.constant 0 : i32
    return %c0_i32, %c0_i32_0, %arg1 : i32, i32, i32
  }
  func.func @transform_2(%arg0: i32, %arg1: i32) -> (i32, i32) {
    %c0_i32 = arith.constant 0 : i32
    %c0_i32_0 = arith.constant 0 : i32
    return %arg0, %c0_i32 : i32, i32
  }
  func.func @transform_3(%arg0: i32, %arg1: i32) -> (i32, i32, i32) {
    %c0_i32 = arith.constant 0 : i32
    %c0_i32_0 = arith.constant 0 : i32
    %c0_i32_1 = arith.constant 0 : i32
    return %c0_i32, %c0_i32_0, %arg1 : i32, i32, i32
  }
  func.func @transform_4(%arg0: i32, %arg1: i32) -> (i32, i32) {
    %c0_i32 = arith.constant 0 : i32
    return %arg0, %arg1 : i32, i32
  }
}

</mosaic_0001>

<llo_original>
// kernel: tpu_custom_call.1
$region0: #{tpu_custom_call.1}
  #allocation0 [shape = 'u32[]', space=smem, size = 0x4, offset = 0x4, fixed_abs, tag = 'smem constant byte address 0x4 - core index']
  #allocation1 [shape = 'u32[144,128]{1,0:T(1,128)}', space=vmem, size = 0x12000, scoped, tag = 'internal scratch']
  %s0 = inlined_call_operand.vmem [shape: bf16[256,128], index: 0, kind: input, shape index: {}]
  %s1 = inlined_call_operand.hbm [shape: bf16[3,128,1024], index: 1, kind: input, shape index: {}]
  %s2 = inlined_call_operand.vmem [shape: f32[256,1], index: 2, kind: input, shape index: {}]
  %s3 = inlined_call_operand.vmem [shape: f32[3,1,1024], index: 3, kind: input, shape index: {}]
  %s4 = inlined_call_operand.hbm [shape: f32[256,1024], index: 4, kind: output, shape index: {}]
  %s5 = sld [smem:[#allocation0]]
  $region94: #{tpu_custom_call.1} parent=0
    _
  %s7 = ssub.s32 1, %s5
  %s8 = scalar_select 0, %s7, %s5
  $region1: #{tpu_custom_call.1} parent=0
    #allocation2 [shape = 'u8[786432]{0}', space=vmem, size = 0xc0000, scoped, tag = 'input window, operand 1']
    #allocation3 [shape = 's32[2]{0}', space=sflag, size = 0x8, scoped, tag = 'scoped memory for tpu_custom_call.1']
    #allocation4 [shape = 's32[2]{0}', space=sflag, size = 0x8, scoped, tag = 'scoped memory for tpu_custom_call.1']
    #allocation5 [shape = 'u8[12288]{0}', space=vmem, size = 0x3000, scoped, tag = 'input window, operand 3']
    #allocation6 [shape = 'u8[524288]{0}', space=vmem, size = 0x80000, scoped, tag = 'output window, operand 0']
    %9 = vsyncpa [#allocation3], 0
    %s10 = scalar_lea.sflag [#allocation3], 1
    %11 = vsyncpa %s10, 0
    %12 = vsyncpa [#allocation4], 0
    %s13 = scalar_lea.sflag [#allocation4], 1
    %14 = vsyncpa %s13, 0
    loop: start=0, step=1, limit=6
    $region2: #{tpu_custom_call.1} parent=1 // loop_pre_header
      _
    $region3: #{tpu_custom_call.1} parent=1 // loop_header
      %s16 = sphi 0, %s20
      %p17 = scmp.ge.s32.totalorder %s16, 6
      %s23 = sphi 0, %s35
      %s24 = sphi 0, %s31
      %s25 = sphi 0, %s23
      %s26 = sphi 0, %s24
      %s27 = sphi 0, %s25
      %s28 = sphi 0, %s26
      %s38 = sphi 0, %s40
      %s41 = sphi 0, %s38
      %s42 = sphi 0, %s41
      %s58 = sphi 0, %s42
      %s64 = sphi 0, %s66
      %s67 = sphi 0, %s64
      %s68 = sphi 0, %s67
      %s84 = sphi 0, %s68
      %s90 = sphi 0, %s92
      %s93 = sphi 0, %s90
      %s94 = sphi 0, %s93
      %s110 = sphi 0, %s94
      %s116 = sphi 0, %s118
      %s119 = sphi 0, %s116
      %s120 = sphi 0, %s119
      %s136 = sphi 0, %s120
      %s144 = sphi 0, %s146
      %s147 = sphi 0, %s144
      %s148 = sphi 0, %s147
      %s164 = sphi 0, %s148
    $region4: #{tpu_custom_call.1} parent=1 // loop_header_branch
      %19 = sbr.rel (%p17) target = $region8
    $region5: #{tpu_custom_call.1} parent=1 // loop_body
      %s21 = ssub.s32 %s16, 1
      %s22 = ssub.s32 %s16, 2
      %s29 = sadd.s32 1, %s24
      %p30 = scmp.ge.s32.totalorder %s29, 2
      %s31 = scalar_select %p30, 0, %s29
      %s32 = sadd.s32 1, %s23
      %s33 = scalar_select %p30, %s32, %s23
      %p34 = scmp.ge.s32.totalorder %s33, 2
      %s35 = scalar_select %p34, 0, %s33
      %s36 = ssub.s32 %s23, %s35
      %p37 = scmp.eq.s32.totalorder %s36, 0
      %s39 = sadd.s32 %s38, 1
      %s40 = scalar_select %p37, %s38, %s39
      %p43 = pneg %p37
      %p44 = scmp.eq.s32.totalorder %s16, 3
      %p45 = por %p43, %p44
      %p46 = scmp.ne.s32.totalorder %s38, %s41
      %p47 = scmp.eq.s32.totalorder %s16, 0
      %p48 = por %p46, %p47
      %p49 = scmp.ne.s32.totalorder %s38, %s41
      %p50 = scmp.eq.s32.totalorder %s21, 3
      %p51 = por %p49, %p50
      %p52 = scmp.ne.s32.totalorder %s41, %s42
      %p53 = scmp.eq.s32.totalorder %s21, 0
      %p54 = por %p52, %p53
      %p55 = scmp.ne.s32.totalorder %s41, %s42
      %p56 = scmp.eq.s32.totalorder %s22, 3
      %p57 = por %p55, %p56
      %p59 = scmp.ne.s32.totalorder %s42, %s58
      %p60 = scmp.eq.s32.totalorder %s22, 0
      %p61 = por %p59, %p60
      %s62 = ssub.s32 %s24, %s31
      %p63 = scmp.eq.s32.totalorder %s62, 0
      %s65 = sadd.s32 %s64, 1
      %s66 = scalar_select %p63, %s64, %s65
      %p69 = pneg %p63
      %p70 = scmp.eq.s32.totalorder %s16, 3
      %p71 = por %p69, %p70
      %p72 = scmp.ne.s32.totalorder %s64, %s67
      %p73 = scmp.eq.s32.totalorder %s16, 0
      %p74 = por %p72, %p73
      %p75 = scmp.ne.s32.totalorder %s64, %s67
      %p76 = scmp.eq.s32.totalorder %s21, 3
      %p77 = por %p75, %p76
      %p78 = scmp.ne.s32.totalorder %s67, %s68
      %p79 = scmp.eq.s32.totalorder %s21, 0
      %p80 = por %p78, %p79
      %p81 = scmp.ne.s32.totalorder %s67, %s68
      %p82 = scmp.eq.s32.totalorder %s22, 3
      %p83 = por %p81, %p82
      %p85 = scmp.ne.s32.totalorder %s68, %s84
      %p86 = scmp.eq.s32.totalorder %s22, 0
      %p87 = por %p85, %p86
      %s88 = ssub.s32 %s23, %s35
      %p89 = scmp.eq.s32.totalorder %s88, 0
      %s91 = sadd.s32 %s90, 1
      %s92 = scalar_select %p89, %s90, %s91
      %p95 = pneg %p89
      %p96 = scmp.eq.s32.totalorder %s16, 3
      %p97 = por %p95, %p96
      %p98 = scmp.ne.s32.totalorder %s90, %s93
      %p99 = scmp.eq.s32.totalorder %s16, 0
      %p100 = por %p98, %p99
      %p101 = scmp.ne.s32.totalorder %s90, %s93
      %p102 = scmp.eq.s32.totalorder %s21, 3
      %p103 = por %p101, %p102
      %p104 = scmp.ne.s32.totalorder %s93, %s94
      %p105 = scmp.eq.s32.totalorder %s21, 0
      %p106 = por %p104, %p105
      %p107 = scmp.ne.s32.totalorder %s93, %s94
      %p108 = scmp.eq.s32.totalorder %s22, 3
      %p109 = por %p107, %p108
      %p111 = scmp.ne.s32.totalorder %s94, %s110
      %p112 = scmp.eq.s32.totalorder %s22, 0
      %p113 = por %p111, %p112
      %s114 = ssub.s32 %s24, %s31
      %p115 = scmp.eq.s32.totalorder %s114, 0
      %s117 = sadd.s32 %s116, 1
      %s118 = scalar_select %p115, %s116, %s117
      %p121 = pneg %p115
      %p122 = scmp.eq.s32.totalorder %s16, 3
      %p123 = por %p121, %p122
      %p124 = scmp.ne.s32.totalorder %s116, %s119
      %p125 = scmp.eq.s32.totalorder %s16, 0
      %p126 = por %p124, %p125
      %p127 = scmp.ne.s32.totalorder %s116, %s119
      %p128 = scmp.eq.s32.totalorder %s21, 3
      %p129 = por %p127, %p128
      %p130 = scmp.ne.s32.totalorder %s119, %s120
      %p131 = scmp.eq.s32.totalorder %s21, 0
      %p132 = por %p130, %p131
      %p133 = scmp.ne.s32.totalorder %s119, %s120
      %p134 = scmp.eq.s32.totalorder %s22, 3
      %p135 = por %p133, %p134
      %p137 = scmp.ne.s32.totalorder %s120, %s136
      %p138 = scmp.eq.s32.totalorder %s22, 0
      %p139 = por %p137, %p138
      %s140 = ssub.s32 %s23, %s35
      %s141 = ssub.s32 %s24, %s31
      %s142 = sor.u32 %s140, %s141
      %p143 = scmp.eq.s32.totalorder %s142, 0
      %s145 = sadd.s32 %s144, 1
      %s146 = scalar_select %p143, %s144, %s145
      %p149 = pneg %p143
      %p150 = scmp.eq.s32.totalorder %s16, 3
      %p151 = por %p149, %p150
      %p152 = scmp.ne.s32.totalorder %s144, %s147
      %p153 = scmp.eq.s32.totalorder %s16, 0
      %p154 = por %p152, %p153
      %p155 = scmp.ne.s32.totalorder %s144, %s147
      %p156 = scmp.eq.s32.totalorder %s21, 3
      %p157 = por %p155, %p156
      %p158 = scmp.ne.s32.totalorder %s147, %s148
      %p159 = scmp.eq.s32.totalorder %s21, 0
      %p160 = por %p158, %p159
      %p161 = scmp.ne.s32.totalorder %s147, %s148
      %p162 = scmp.eq.s32.totalorder %s22, 3
      %p163 = por %p161, %p162
      %p165 = scmp.ne.s32.totalorder %s148, %s164
      %p166 = scmp.eq.s32.totalorder %s22, 0
      %p167 = por %p165, %p166
      %p168 = scmp.le.s32.totalorder 1, %s16
      %p169 = scmp.lt.s32.totalorder %s16, 5
      %p170 = pnand %p168, %p169
      %p171 = pneg %p170
      // Predicated region
      $region9: #{tpu_custom_call.1} parent=5 // pred_check
        _
      $region10: #{tpu_custom_call.1} parent=5 // pred_check_branch
        %173 = sbr.rel (%p170) target = $region12
      $region11: #{tpu_custom_call.1} parent=5 // pred_region
        %s174 = ssub.s32 %s16, 1
      $region12: #{tpu_custom_call.1} parent=5 // pred_fallthru
        _
      %p175 = scmp.lt.s32.totalorder %s16, 4
      // Predicated region
      $region13: #{tpu_custom_call.1} parent=5 // pred_check
        %p176 = pneg %p175
      $region14: #{tpu_custom_call.1} parent=5 // pred_check_branch
        %178 = sbr.rel (%p176) target = $region16
      $region15: #{tpu_custom_call.1} parent=5 // pred_region
        // Predicated region
        $region17: #{tpu_custom_call.1} parent=15 // pred_check
          %p179 = pneg %p48
        $region18: #{tpu_custom_call.1} parent=15 // pred_check_branch
          %181 = sbr.rel (%p179) target = $region20
        $region19: #{tpu_custom_call.1} parent=15 // pred_region
          %s182 = smul.u32 16, %s23
          %p183 = scmp.lt.s32.totalorder %s182, 31
          %s184 = scalar_select %p183, %s182, 31
          %s185 = smul.addr %s184, 4
          %s186 = scalar_lea.vmem %s0, %s185
          %s187 = smul.u32 16, %s23
        $region20: #{tpu_custom_call.1} parent=15 // pred_fallthru
          _
        // Predicated region
        $region21: #{tpu_custom_call.1} parent=15 // pred_check
          %p188 = pneg %p74
        $region22: #{tpu_custom_call.1} parent=15 // pred_check_branch
          %190 = sbr.rel (%p188) target = $region24
        $region23: #{tpu_custom_call.1} parent=15 // pred_region
          %s191 = sand.u32 %s64, 1
          %s192 = scalar_lea.sflag [#allocation3], %s191
          %s193 = sand.u32 %s64, 1
          %s194 = smul.addr %s193, 768
          %s195 = scalar_lea.vmem [#allocation2], %s194
          %s196 = smul.u32 4, %s24
          %s198 = ssub.s32 12288, 12288
          %199 = vsyncadd %s192, %s198
          %s200 = smul.addr %s196, 64
          %s201 = scalar_lea.hbm %s1, %s200
          %s202 = sshll.u32 %s195, 4
          %s203 = int_to_ptr.vmem [resolvable:$true] %s202
          %208 = dma.hbm_to_vmem [thread:$0]  %s201, 12288, %s203, %s192, 512, 256, 16
        $region24: #{tpu_custom_call.1} parent=15 // pred_fallthru
          _
        // Predicated region
        $region25: #{tpu_custom_call.1} parent=15 // pred_check
          %p209 = pneg %p100
        $region26: #{tpu_custom_call.1} parent=15 // pred_check_branch
          %211 = sbr.rel (%p209) target = $region28
        $region27: #{tpu_custom_call.1} parent=15 // pred_region
          %s212 = smul.u32 16, %s23
          %p213 = scmp.lt.s32.totalorder %s212, 31
          %s214 = scalar_select %p213, %s212, 31
          %s215 = smul.addr %s214, 8
          %s216 = scalar_lea.vmem %s2, %s215
          %s217 = smul.u32 16, %s23
        $region28: #{tpu_custom_call.1} parent=15 // pred_fallthru
          _
        // Predicated region
        $region29: #{tpu_custom_call.1} parent=15 // pred_check
          %p218 = pneg %p126
        $region30: #{tpu_custom_call.1} parent=15 // pred_check_branch
          %220 = sbr.rel (%p218) target = $region32
        $region31: #{tpu_custom_call.1} parent=15 // pred_region
          %s221 = sand.u32 %s116, 1
          %s222 = sand.u32 %s116, 1
          %s223 = smul.addr %s222, 12
          %s224 = scalar_lea.vmem [#allocation5], %s223
          %s225 = smul.u32 4, %s24
          %s226 = scalar_lea.vmem %s3, %s225
          // Predicated region
          $region33: #{tpu_custom_call.1} parent=31 // pred_check
            _
          $region34: #{tpu_custom_call.1} parent=31 // pred_check_branch
            %228 = sbr.rel (0) target = $region36
          $region35: #{tpu_custom_call.1} parent=31 // pred_region
            // Predicated region
            $region37: #{tpu_custom_call.1} parent=35 // pred_check
              _
            $region38: #{tpu_custom_call.1} parent=35 // pred_check_branch
              %230 = sbr.rel target = $region40
            $region39: #{tpu_custom_call.1} parent=35 // pred_region
              // Predicated region
              $region52: #{tpu_custom_call.1} parent=39 // pred_check
                _
              $region53: #{tpu_custom_call.1} parent=39 // pred_check_branch
                %250 = sbr.rel (0) target = $region55
              $region54: #{tpu_custom_call.1} parent=39 // pred_region
                loop: start=0, step=1, limit=1
                $region56: #{tpu_custom_call.1} parent=54 // loop_pre_header
                  _
                $region57: #{tpu_custom_call.1} parent=54 // loop_header
                  %s252 = sphi 0, %s256
                  %p253 = scmp.ge.s32.totalorder %s252, 1
                  %s257 = sphi %s226, %s226
                  %s258 = sphi %s224, %s224
                $region58: #{tpu_custom_call.1} parent=54 // loop_header_branch
                  %255 = sbr.rel (%p253) target = $region62
                $region59: #{tpu_custom_call.1} parent=54 // loop_body
                  _
                $region60: #{tpu_custom_call.1} parent=54 // loop_footer
                  %s256 = sadd.s32 1, %s252
                $region61: #{tpu_custom_call.1} parent=54 // loop_footer_branch
                  %251 = sbr.rel target = $region57
                $region62: #{tpu_custom_call.1} parent=54 // loop_exit
                  _
                %s260 = ssub.s32 16, 1
                loop: start=0, step=1, limit=1
                $region63: #{tpu_custom_call.1} parent=54 // loop_pre_header
                  _
                $region64: #{tpu_custom_call.1} parent=54 // loop_header
                  %s262 = sphi 0, %s266
                  %p263 = scmp.ge.s32.totalorder %s262, 1
                  %s267 = sphi %s226, %s226
                  %s268 = sphi %s224, %s224
                $region65: #{tpu_custom_call.1} parent=54 // loop_header_branch
                  %265 = sbr.rel (%p263) target = $region69
                $region66: #{tpu_custom_call.1} parent=54 // loop_body
                  %v269 = vld [vmem:[%s267] sm:%s260]
                  %270 = vst [vmem:[%s268] sm:%s260] %v269
                  %v271 = vld [vmem:[%s267 + $0x8] sm:%s260]
                  %272 = vst [vmem:[%s268 + $0x4] sm:%s260] %v271
                  %v273 = vld [vmem:[%s267 + $0x10] sm:%s260]
                  %274 = vst [vmem:[%s268 + $0x8] sm:%s260] %v273
                $region67: #{tpu_custom_call.1} parent=54 // loop_footer
                  %s266 = sadd.s32 1, %s262
                $region68: #{tpu_custom_call.1} parent=54 // loop_footer_branch
                  %261 = sbr.rel target = $region64
                $region69: #{tpu_custom_call.1} parent=54 // loop_exit
                  _
              $region55: #{tpu_custom_call.1} parent=39 // pred_fallthru
                _
            $region40: #{tpu_custom_call.1} parent=35 // pred_fallthru
              _
            // Predicated region
            $region41: #{tpu_custom_call.1} parent=35 // pred_check
              _
            $region42: #{tpu_custom_call.1} parent=35 // pred_check_branch
              %232 = sbr.rel (0) target = $region44
            $region43: #{tpu_custom_call.1} parent=35 // pred_region
              %s234 = ssub.s32 16, 1
              loop: start=0, step=1, limit=1
              $region45: #{tpu_custom_call.1} parent=43 // loop_pre_header
                _
              $region46: #{tpu_custom_call.1} parent=43 // loop_header
                %s236 = sphi 0, %s240
                %p237 = scmp.ge.s32.totalorder %s236, 1
                %s241 = sphi %s226, %s226
                %s242 = sphi %s224, %s224
              $region47: #{tpu_custom_call.1} parent=43 // loop_header_branch
                %239 = sbr.rel (%p237) target = $region51
              $region48: #{tpu_custom_call.1} parent=43 // loop_body
                %v243 = vld [vmem:[%s241] sm:%s234]
                %244 = vst [vmem:[%s242] sm:%s234] %v243
                %v245 = vld [vmem:[%s241 + $0x8] sm:%s234]
                %246 = vst [vmem:[%s242 + $0x4] sm:%s234] %v245
                %v247 = vld [vmem:[%s241 + $0x10] sm:%s234]
                %248 = vst [vmem:[%s242 + $0x8] sm:%s234] %v247
              $region49: #{tpu_custom_call.1} parent=43 // loop_footer
                %s240 = sadd.s32 1, %s236
              $region50: #{tpu_custom_call.1} parent=43 // loop_footer_branch
                %235 = sbr.rel target = $region46
              $region51: #{tpu_custom_call.1} parent=43 // loop_exit
                _
            $region44: #{tpu_custom_call.1} parent=35 // pred_fallthru
              _
          $region36: #{tpu_custom_call.1} parent=31 // pred_fallthru
            _
          %275 = vnop
        $region32: #{tpu_custom_call.1} parent=15 // pred_fallthru
          _
      $region16: #{tpu_custom_call.1} parent=5 // pred_fallthru
        _
      %p276 = scmp.le.s32.totalorder 1, %s16
      %p277 = scmp.lt.s32.totalorder %s16, 5
      %p278 = pnand %p276, %p277
      %p279 = pneg %p278
      // Predicated region
      $region70: #{tpu_custom_call.1} parent=5 // pred_check
        _
      $region71: #{tpu_custom_call.1} parent=5 // pred_check_branch
        %281 = sbr.rel (%p278) target = $region73
      $region72: #{tpu_custom_call.1} parent=5 // pred_region
        %s282 = ssub.s32 %s16, 1
        %s283 = sand.u32 %s67, 1
        %s284 = scalar_lea.sflag [#allocation3], %s283
        %s285 = sand.u32 %s67, 1
        %s286 = smul.addr %s285, 768
        %s287 = scalar_lea.vmem [#allocation2], %s286
        // Predicated region
        $region74: #{tpu_custom_call.1} parent=72 // pred_check
          %p288 = pneg %p80
        $region75: #{tpu_custom_call.1} parent=72 // pred_check_branch
          %290 = sbr.rel (%p288) target = $region77
        $region76: #{tpu_custom_call.1} parent=72 // pred_region
          %291 = dma.done %s284, 12288
        $region77: #{tpu_custom_call.1} parent=72 // pred_fallthru
          _
        %s292 = sand.u32 %s119, 1
        %s293 = sand.u32 %s119, 1
        %s294 = smul.addr %s293, 12
        %s295 = scalar_lea.vmem [#allocation5], %s294
        // Predicated region
        $region78: #{tpu_custom_call.1} parent=72 // pred_check
          %p296 = pneg %p132
        $region79: #{tpu_custom_call.1} parent=72 // pred_check_branch
          %298 = sbr.rel (%p296) target = $region81
        $region80: #{tpu_custom_call.1} parent=72 // pred_region
          _
        $region81: #{tpu_custom_call.1} parent=72 // pred_fallthru
          _
        %s299 = smul.u32 16, %s25
        %p300 = scmp.lt.s32.totalorder %s299, 31
        %s301 = scalar_select %p300, %s299, 31
        %s302 = smul.addr %s301, 4
        %s303 = scalar_lea.vmem %s0, %s302
        %p304 = pneg %p54
        %p305 = pneg %p51
        %s306 = sand.u32 %s67, 1
        %s307 = scalar_lea.sflag [#allocation3], %s306
        %s308 = sand.u32 %s67, 1
        %s309 = smul.addr %s308, 768
        %s310 = scalar_lea.vmem [#allocation2], %s309
        %p311 = pneg %p80
        %p312 = pneg %p77
        %s313 = smul.u32 16, %s25
        %p314 = scmp.lt.s32.totalorder %s313, 31
        %s315 = scalar_select %p314, %s313, 31
        %s316 = smul.addr %s315, 8
        %s317 = scalar_lea.vmem %s2, %s316
        %p318 = pneg %p106
        %p319 = pneg %p103
        %s320 = sand.u32 %s119, 1
        %s321 = sand.u32 %s119, 1
        %s322 = smul.addr %s321, 12
        %s323 = scalar_lea.vmem [#allocation5], %s322
        %p324 = pneg %p132
        %p325 = pneg %p129
        %p326 = pneg %p160
        %p327 = pneg %p157
        %s328 = sand.u32 %s147, 1
        %s329 = scalar_lea.sflag [#allocation4], %s328
        %s330 = sand.u32 %s147, 1
        %s331 = smul.addr %s330, 512
        %s332 = scalar_lea.vmem [#allocation6], %s331
        %s333 = smul.u32 16, %s25
        %p334 = scmp.lt.s32.totalorder %s333, 31
        %s335 = scalar_select %p334, %s333, 31
        %s336 = smul.addr %s335, 4
        %s337 = scalar_lea.vmem %s0, %s336
        %s338 = smul.u32 16, %s25
        %s339 = smul.u32 4, %s26
        %s340 = smul.u32 16, %s25
        %p341 = scmp.lt.s32.totalorder %s340, 31
        %s342 = scalar_select %p341, %s340, 31
        %s343 = smul.addr %s342, 8
        %s344 = scalar_lea.vmem %s2, %s343
        %s345 = smul.u32 16, %s25
        %s346 = smul.u32 4, %s26
        %s347 = smul.u32 16, %s25
        %s348 = smul.u32 4, %s26
        %v350 = vld [vmem:[%s337] sm:$0xf]
        %v351 = vld [vmem:[%s337 + $0x4] sm:$0xf]
        %v352 = vld [vmem:[%s337 + $0x8] sm:$0xf]
        %v353 = vld [vmem:[%s337 + $0xc] sm:$0xf]
        %v354 = vld [vmem:[%s337 + $0x10] sm:$0xf]
        %v355 = vld [vmem:[%s337 + $0x14] sm:$0xf]
        %v356 = vld [vmem:[%s337 + $0x18] sm:$0xf]
        %v357 = vld [vmem:[%s337 + $0x1c] sm:$0xf]
        %v358 = vld [vmem:[%s337 + $0x20] sm:$0xf]
        %v359 = vld [vmem:[%s337 + $0x24] sm:$0xf]
        %v360 = vld [vmem:[%s337 + $0x28] sm:$0xf]
        %v361 = vld [vmem:[%s337 + $0x2c] sm:$0xf]
        %v362 = vld [vmem:[%s337 + $0x30] sm:$0xf]
        %v363 = vld [vmem:[%s337 + $0x34] sm:$0xf]
        %v364 = vld [vmem:[%s337 + $0x38] sm:$0xf]
        %v365 = vld [vmem:[%s337 + $0x3c] sm:$0xf]
        %v366 = vld [vmem:[%s287] sm:$0xff]
        %v367 = vld [vmem:[%s287 + $0x8] sm:$0xff]
        %v368 = vld [vmem:[%s287 + $0x10] sm:$0xff]
        %v369 = vld [vmem:[%s287 + $0x18] sm:$0xff]
        %v370 = vld [vmem:[%s287 + $0x20] sm:$0xff]
        %v371 = vld [vmem:[%s287 + $0x28] sm:$0xff]
        %v372 = vld [vmem:[%s287 + $0x30] sm:$0xff]
        %v373 = vld [vmem:[%s287 + $0x38] sm:$0xff]
        %v374 = vld [vmem:[%s287 + $0x40] sm:$0xff]
        %v375 = vld [vmem:[%s287 + $0x48] sm:$0xff]
        %v376 = vld [vmem:[%s287 + $0x50] sm:$0xff]
        %v377 = vld [vmem:[%s287 + $0x58] sm:$0xff]
        %v378 = vld [vmem:[%s287 + $0x60] sm:$0xff]
        %v379 = vld [vmem:[%s287 + $0x68] sm:$0xff]
        %v380 = vld [vmem:[%s287 + $0x70] sm:$0xff]
        %v381 = vld [vmem:[%s287 + $0x78] sm:$0xff]
        %v382 = vld [vmem:[%s287 + $0x80] sm:$0xff]
        %v383 = vld [vmem:[%s287 + $0x88] sm:$0xff]
        %v384 = vld [vmem:[%s287 + $0x90] sm:$0xff]
        %v385 = vld [vmem:[%s287 + $0x98] sm:$0xff]
        %v386 = vld [vmem:[%s287 + $0xa0] sm:$0xff]
        %v387 = vld [vmem:[%s287 + $0xa8] sm:$0xff]
        %v388 = vld [vmem:[%s287 + $0xb0] sm:$0xff]
        %v389 = vld [vmem:[%s287 + $0xb8] sm:$0xff]
        %v390 = vld [vmem:[%s287 + $0xc0] sm:$0xff]
        %v391 = vld [vmem:[%s287 + $0xc8] sm:$0xff]
        %v392 = vld [vmem:[%s287 + $0xd0] sm:$0xff]
        %v393 = vld [vmem:[%s287 + $0xd8] sm:$0xff]
        %v394 = vld [vmem:[%s287 + $0xe0] sm:$0xff]
        %v395 = vld [vmem:[%s287 + $0xe8] sm:$0xff]
        %v396 = vld [vmem:[%s287 + $0xf0] sm:$0xff]
        %v397 = vld [vmem:[%s287 + $0xf8] sm:$0xff]
        %v414 = vunpack.c.l.b16 %v350
        %v415 = vunpack.c.l.b16 %v351
        %v416 = vunpack.c.l.b16 %v352
        %v417 = vunpack.c.l.b16 %v353
        %v418 = vunpack.c.l.b16 %v354
        %v419 = vunpack.c.l.b16 %v355
        %v420 = vunpack.c.l.b16 %v356
        %v421 = vunpack.c.l.b16 %v357
        %v422 = vunpack.c.l.b16 %v358
        %v423 = vunpack.c.l.b16 %v359
        %v424 = vunpack.c.l.b16 %v360
        %v425 = vunpack.c.l.b16 %v361
        %v426 = vunpack.c.l.b16 %v362
        %v427 = vunpack.c.l.b16 %v363
        %v428 = vunpack.c.l.b16 %v364
        %v429 = vunpack.c.l.b16 %v365
        %v430 = vpack.c.b16 %v415, %v414
        %v431 = vpack.c.b16 %v417, %v416
        %v432 = vpack.c.b16 %v419, %v418
        %v433 = vpack.c.b16 %v421, %v420
        %v434 = vpack.c.b16 %v423, %v422
        %v435 = vpack.c.b16 %v425, %v424
        %v436 = vpack.c.b16 %v427, %v426
        %v437 = vpack.c.b16 %v429, %v428
        %v478 = vunpack.c.l.b16 %v366
        %v479 = vunpack.c.h.b16 %v366
        %v480 = vunpack.c.l.b16 %v367
        %v481 = vunpack.c.h.b16 %v367
        %v482 = vunpack.c.l.b16 %v368
        %v483 = vunpack.c.h.b16 %v368
        %v484 = vunpack.c.l.b16 %v369
        %v485 = vunpack.c.h.b16 %v369
        %v486 = vunpack.c.l.b16 %v370
        %v487 = vunpack.c.h.b16 %v370
        %v488 = vunpack.c.l.b16 %v371
        %v489 = vunpack.c.h.b16 %v371
        %v490 = vunpack.c.l.b16 %v372
        %v491 = vunpack.c.h.b16 %v372
        %v492 = vunpack.c.l.b16 %v373
        %v493 = vunpack.c.h.b16 %v373
        %v494 = vunpack.c.l.b16 %v374
        %v495 = vunpack.c.h.b16 %v374
        %v496 = vunpack.c.l.b16 %v375
        %v497 = vunpack.c.h.b16 %v375
        %v498 = vunpack.c.l.b16 %v376
        %v499 = vunpack.c.h.b16 %v376
        %v500 = vunpack.c.l.b16 %v377
        %v501 = vunpack.c.h.b16 %v377
        %v502 = vunpack.c.l.b16 %v378
        %v503 = vunpack.c.h.b16 %v378
        %v504 = vunpack.c.l.b16 %v379
        %v505 = vunpack.c.h.b16 %v379
        %v506 = vunpack.c.l.b16 %v380
        %v507 = vunpack.c.h.b16 %v380
        %v508 = vunpack.c.l.b16 %v381
        %v509 = vunpack.c.h.b16 %v381
        %v510 = vunpack.c.l.b16 %v382
        %v511 = vunpack.c.h.b16 %v382
        %v512 = vunpack.c.l.b16 %v383
        %v513 = vunpack.c.h.b16 %v383
        %v514 = vunpack.c.l.b16 %v384
        %v515 = vunpack.c.h.b16 %v384
        %v516 = vunpack.c.l.b16 %v385
        %v517 = vunpack.c.h.b16 %v385
        %v518 = vunpack.c.l.b16 %v386
        %v519 = vunpack.c.h.b16 %v386
        %v520 = vunpack.c.l.b16 %v387
        %v521 = vunpack.c.h.b16 %v387
        %v522 = vunpack.c.l.b16 %v388
        %v523 = vunpack.c.h.b16 %v388
        %v524 = vunpack.c.l.b16 %v389
        %v525 = vunpack.c.h.b16 %v389
        %v526 = vunpack.c.l.b16 %v390
        %v527 = vunpack.c.h.b16 %v390
        %v528 = vunpack.c.l.b16 %v391
        %v529 = vunpack.c.h.b16 %v391
        %v530 = vunpack.c.l.b16 %v392
        %v531 = vunpack.c.h.b16 %v392
        %v532 = vunpack.c.l.b16 %v393
        %v533 = vunpack.c.h.b16 %v393
        %v534 = vunpack.c.l.b16 %v394
        %v535 = vunpack.c.h.b16 %v394
        %v536 = vunpack.c.l.b16 %v395
        %v537 = vunpack.c.h.b16 %v395
        %v538 = vunpack.c.l.b16 %v396
        %v539 = vunpack.c.h.b16 %v396
        %v540 = vunpack.c.l.b16 %v397
        %v541 = vunpack.c.h.b16 %v397
        %v542 = vpack.c.b16 %v482, %v478
        %v543 = vpack.c.b16 %v483, %v479
        %v544 = vpack.c.b16 %v484, %v480
        %v545 = vpack.c.b16 %v485, %v481
        %v546 = vpack.c.b16 %v490, %v486
        %v547 = vpack.c.b16 %v491, %v487
        %v548 = vpack.c.b16 %v492, %v488
        %v549 = vpack.c.b16 %v493, %v489
        %v550 = vpack.c.b16 %v498, %v494
        %v551 = vpack.c.b16 %v499, %v495
        %v552 = vpack.c.b16 %v500, %v496
        %v553 = vpack.c.b16 %v501, %v497
        %v554 = vpack.c.b16 %v506, %v502
        %v555 = vpack.c.b16 %v507, %v503
        %v556 = vpack.c.b16 %v508, %v504
        %v557 = vpack.c.b16 %v509, %v505
        %v558 = vpack.c.b16 %v514, %v510
        %v559 = vpack.c.b16 %v515, %v511
        %v560 = vpack.c.b16 %v516, %v512
        %v561 = vpack.c.b16 %v517, %v513
        %v562 = vpack.c.b16 %v522, %v518
        %v563 = vpack.c.b16 %v523, %v519
        %v564 = vpack.c.b16 %v524, %v520
        %v565 = vpack.c.b16 %v525, %v521
        %v566 = vpack.c.b16 %v530, %v526
        %v567 = vpack.c.b16 %v531, %v527
        %v568 = vpack.c.b16 %v532, %v528
        %v569 = vpack.c.b16 %v533, %v529
        %v570 = vpack.c.b16 %v538, %v534
        %v571 = vpack.c.b16 %v539, %v535
        %v572 = vpack.c.b16 %v540, %v536
        %v573 = vpack.c.b16 %v541, %v537
        %606 = vmatprep.subr.bf16.mxu0 %v571
        %607 = vmatpush1.bf16.msra.mxu0 %v570
        %608 = vmatprep.subr.bf16.mxu0 %v567
        %609 = vmatpush1.bf16.msra.mxu0 %v566
        %610 = vmatprep.subr.bf16.mxu0 %v563
        %611 = vmatpush1.bf16.msra.mxu0 %v562
        %612 = vmatprep.subr.bf16.mxu0 %v559
        %613 = vmatpush1.bf16.msra.mxu0 %v558
        %614 = vmatprep.subr.bf16.mxu0 %v555
        %615 = vmatpush1.bf16.msra.mxu0 %v554
        %616 = vmatprep.subr.bf16.mxu0 %v551
        %617 = vmatpush1.bf16.msra.mxu0 %v550
        %618 = vmatprep.subr.bf16.mxu0 %v547
        %619 = vmatpush1.bf16.msra.mxu0 %v546
        %620 = vmatprep.subr.bf16.mxu0 %v543
        %621 = vmatpush1.bf16.msra.mxu0 %v542
        %622 = vmatprep.subr.bf16.mxu0 0
        %623 = vmatpush2.bf16.msra.mxu0 0
        %624 = vmatprep.subr.bf16.mxu0 0
        %625 = vmatpush2.bf16.msra.mxu0 0
        %626 = vmatprep.subr.bf16.mxu0 0
        %627 = vmatpush2.bf16.msra.mxu0 0
        %628 = vmatprep.subr.bf16.mxu0 0
        %629 = vmatpush2.bf16.msra.mxu0 0
        %630 = vmatprep.subr.bf16.mxu0 0
        %631 = vmatpush2.bf16.msra.mxu0 0
        %632 = vmatprep.subr.bf16.mxu0 0
        %633 = vmatpush2.bf16.msra.mxu0 0
        %634 = vmatprep.subr.bf16.mxu0 0
        %635 = vmatpush2.bf16.msra.mxu0 0
        %636 = vmatprep.subr.bf16.mxu0 0
        %637 = vmatpush2.bf16.msra.mxu0 0
        %638 = vmatprep.mubr.bf16.mxu0 0
        %639 = vmatmul.mubr.bf16.gmra.mxu0 %v430
        %v640 = vpop.f32.mrf.mxu0
        %v641 = vadd.f32 0.0, %v640
        %v642 = vpop.f32.mrf.mxu0
        %v643 = vadd.f32 0.0, %v642
        %v644 = vpop.f32.mrf.mxu0
        %v645 = vadd.f32 0.0, %v644
        %v646 = vpop.f32.mrf.mxu0
        %v647 = vadd.f32 0.0, %v646
        %648 = vmatprep.mubr.bf16.mxu0 0
        %649 = vmatmul.mubr.bf16.gmra.mxu0 %v431
        %v650 = vpop.f32.mrf.mxu0
        %v651 = vadd.f32 0.0, %v650
        %v652 = vpop.f32.mrf.mxu0
        %v653 = vadd.f32 0.0, %v652
        %v654 = vpop.f32.mrf.mxu0
        %v655 = vadd.f32 0.0, %v654
        %v656 = vpop.f32.mrf.mxu0
        %v657 = vadd.f32 0.0, %v656
        %658 = vmatprep.mubr.bf16.mxu0 0
        %659 = vmatmul.mubr.bf16.gmra.mxu0 %v432
        %v660 = vpop.f32.mrf.mxu0
        %v661 = vadd.f32 0.0, %v660
        %v662 = vpop.f32.mrf.mxu0
        %v663 = vadd.f32 0.0, %v662
        %v664 = vpop.f32.mrf.mxu0
        %v665 = vadd.f32 0.0, %v664
        %v666 = vpop.f32.mrf.mxu0
        %v667 = vadd.f32 0.0, %v666
        %668 = vmatprep.mubr.bf16.mxu0 0
        %669 = vmatmul.mubr.bf16.gmra.mxu0 %v433
        %v670 = vpop.f32.mrf.mxu0
        %v671 = vadd.f32 0.0, %v670
        %v672 = vpop.f32.mrf.mxu0
        %v673 = vadd.f32 0.0, %v672
        %v674 = vpop.f32.mrf.mxu0
        %v675 = vadd.f32 0.0, %v674
        %v676 = vpop.f32.mrf.mxu0
        %v677 = vadd.f32 0.0, %v676
        %678 = vmatprep.mubr.bf16.mxu0 0
        %679 = vmatmul.mubr.bf16.gmra.mxu0 %v434
        %v680 = vpop.f32.mrf.mxu0
        %v681 = vadd.f32 0.0, %v680
        %v682 = vpop.f32.mrf.mxu0
        %v683 = vadd.f32 0.0, %v682
        %v684 = vpop.f32.mrf.mxu0
        %v685 = vadd.f32 0.0, %v684
        %v686 = vpop.f32.mrf.mxu0
        %v687 = vadd.f32 0.0, %v686
        %688 = vmatprep.mubr.bf16.mxu0 0
        %689 = vmatmul.mubr.bf16.gmra.mxu0 %v435
        %v690 = vpop.f32.mrf.mxu0
        %v691 = vadd.f32 0.0, %v690
        %v692 = vpop.f32.mrf.mxu0
        %v693 = vadd.f32 0.0, %v692
        %v694 = vpop.f32.mrf.mxu0
        %v695 = vadd.f32 0.0, %v694
        %v696 = vpop.f32.mrf.mxu0
        %v697 = vadd.f32 0.0, %v696
        %698 = vmatprep.mubr.bf16.mxu0 0
        %699 = vmatmul.mubr.bf16.gmra.mxu0 %v436
        %v700 = vpop.f32.mrf.mxu0
        %v701 = vadd.f32 0.0, %v700
        %v702 = vpop.f32.mrf.mxu0
        %v703 = vadd.f32 0.0, %v702
        %v704 = vpop.f32.mrf.mxu0
        %v705 = vadd.f32 0.0, %v704
        %v706 = vpop.f32.mrf.mxu0
        %v707 = vadd.f32 0.0, %v706
        %708 = vmatprep.mubr.bf16.mxu0 0
        %709 = vmatmul.mubr.bf16.gmra.mxu0 %v437
        %v710 = vpop.f32.mrf.mxu0
        %v711 = vadd.f32 0.0, %v710
        %v712 = vpop.f32.mrf.mxu0
        %v713 = vadd.f32 0.0, %v712
        %v714 = vpop.f32.mrf.mxu0
        %v715 = vadd.f32 0.0, %v714
        %v716 = vpop.f32.mrf.mxu0
        %v717 = vadd.f32 0.0, %v716
        %718 = vdwg.mxu0
        %719 = vmatprep.subr.bf16.mxu0 %v573
        %720 = vmatpush1.bf16.msra.mxu0 %v572
        %721 = vmatprep.subr.bf16.mxu0 %v569
        %722 = vmatpush1.bf16.msra.mxu0 %v568
        %723 = vmatprep.subr.bf16.mxu0 %v565
        %724 = vmatpush1.bf16.msra.mxu0 %v564
        %725 = vmatprep.subr.bf16.mxu0 %v561
        %726 = vmatpush1.bf16.msra.mxu0 %v560
        %727 = vmatprep.subr.bf16.mxu0 %v557
        %728 = vmatpush1.bf16.msra.mxu0 %v556
        %729 = vmatprep.subr.bf16.mxu0 %v553
        %730 = vmatpush1.bf16.msra.mxu0 %v552
        %731 = vmatprep.subr.bf16.mxu0 %v549
        %732 = vmatpush1.bf16.msra.mxu0 %v548
        %733 = vmatprep.subr.bf16.mxu0 %v545
        %734 = vmatpush1.bf16.msra.mxu0 %v544
        %735 = vmatprep.subr.bf16.mxu0 0
        %736 = vmatpush2.bf16.msra.mxu0 0
        %737 = vmatprep.subr.bf16.mxu0 0
        %738 = vmatpush2.bf16.msra.mxu0 0
        %739 = vmatprep.subr.bf16.mxu0 0
        %740 = vmatpush2.bf16.msra.mxu0 0
        %741 = vmatprep.subr.bf16.mxu0 0
        %742 = vmatpush2.bf16.msra.mxu0 0
        %743 = vmatprep.subr.bf16.mxu0 0
        %744 = vmatpush2.bf16.msra.mxu0 0
        %745 = vmatprep.subr.bf16.mxu0 0
        %746 = vmatpush2.bf16.msra.mxu0 0
        %747 = vmatprep.subr.bf16.mxu0 0
        %748 = vmatpush2.bf16.msra.mxu0 0
        %749 = vmatprep.subr.bf16.mxu0 0
        %750 = vmatpush2.bf16.msra.mxu0 0
        %751 = vmatprep.mubr.bf16.mxu0 0
        %752 = vmatmul.mubr.bf16.gmra.mxu0 %v430
        %v753 = vpop.f32.mrf.mxu0
        %v754 = vadd.f32 0.0, %v753
        %v755 = vpop.f32.mrf.mxu0
        %v756 = vadd.f32 0.0, %v755
        %v757 = vpop.f32.mrf.mxu0
        %v758 = vadd.f32 0.0, %v757
        %v759 = vpop.f32.mrf.mxu0
        %v760 = vadd.f32 0.0, %v759
        %761 = vmatprep.mubr.bf16.mxu0 0
        %762 = vmatmul.mubr.bf16.gmra.mxu0 %v431
        %v763 = vpop.f32.mrf.mxu0
        %v764 = vadd.f32 0.0, %v763
        %v765 = vpop.f32.mrf.mxu0
        %v766 = vadd.f32 0.0, %v765
        %v767 = vpop.f32.mrf.mxu0
        %v768 = vadd.f32 0.0, %v767
        %v769 = vpop.f32.mrf.mxu0
        %v770 = vadd.f32 0.0, %v769
        %771 = vmatprep.mubr.bf16.mxu0 0
        %772 = vmatmul.mubr.bf16.gmra.mxu0 %v432
        %v773 = vpop.f32.mrf.mxu0
        %v774 = vadd.f32 0.0, %v773
        %v775 = vpop.f32.mrf.mxu0
        %v776 = vadd.f32 0.0, %v775
        %v777 = vpop.f32.mrf.mxu0
        %v778 = vadd.f32 0.0, %v777
        %v779 = vpop.f32.mrf.mxu0
        %v780 = vadd.f32 0.0, %v779
        %781 = vmatprep.mubr.bf16.mxu0 0
        %782 = vmatmul.mubr.bf16.gmra.mxu0 %v433
        %v783 = vpop.f32.mrf.mxu0
        %v784 = vadd.f32 0.0, %v783
        %v785 = vpop.f32.mrf.mxu0
        %v786 = vadd.f32 0.0, %v785
        %v787 = vpop.f32.mrf.mxu0
        %v788 = vadd.f32 0.0, %v787
        %v789 = vpop.f32.mrf.mxu0
        %v790 = vadd.f32 0.0, %v789
        %791 = vmatprep.mubr.bf16.mxu0 0
        %792 = vmatmul.mubr.bf16.gmra.mxu0 %v434
        %v793 = vpop.f32.mrf.mxu0
        %v794 = vadd.f32 0.0, %v793
        %v795 = vpop.f32.mrf.mxu0
        %v796 = vadd.f32 0.0, %v795
        %v797 = vpop.f32.mrf.mxu0
        %v798 = vadd.f32 0.0, %v797
        %v799 = vpop.f32.mrf.mxu0
        %v800 = vadd.f32 0.0, %v799
        %801 = vmatprep.mubr.bf16.mxu0 0
        %802 = vmatmul.mubr.bf16.gmra.mxu0 %v435
        %v803 = vpop.f32.mrf.mxu0
        %v804 = vadd.f32 0.0, %v803
        %v805 = vpop.f32.mrf.mxu0
        %v806 = vadd.f32 0.0, %v805
        %v807 = vpop.f32.mrf.mxu0
        %v808 = vadd.f32 0.0, %v807
        %v809 = vpop.f32.mrf.mxu0
        %v810 = vadd.f32 0.0, %v809
        %811 = vmatprep.mubr.bf16.mxu0 0
        %812 = vmatmul.mubr.bf16.gmra.mxu0 %v436
        %v813 = vpop.f32.mrf.mxu0
        %v814 = vadd.f32 0.0, %v813
        %v815 = vpop.f32.mrf.mxu0
        %v816 = vadd.f32 0.0, %v815
        %v817 = vpop.f32.mrf.mxu0
        %v818 = vadd.f32 0.0, %v817
        %v819 = vpop.f32.mrf.mxu0
        %v820 = vadd.f32 0.0, %v819
        %821 = vmatprep.mubr.bf16.mxu0 0
        %822 = vmatmul.mubr.bf16.gmra.mxu0 %v437
        %v823 = vpop.f32.mrf.mxu0
        %v824 = vadd.f32 0.0, %v823
        %v825 = vpop.f32.mrf.mxu0
        %v826 = vadd.f32 0.0, %v825
        %v827 = vpop.f32.mrf.mxu0
        %v828 = vadd.f32 0.0, %v827
        %v829 = vpop.f32.mrf.mxu0
        %v830 = vadd.f32 0.0, %v829
        %831 = vdwg.mxu0
        %v832 = vld [vmem:[%s295] sm:$0xf]
        %v834 = vlaneseq
        %v835 = vshrl.u32 %v834, 7
        %v836 = vsub.s32 0, %v835
        %v837 = vrot.slane %v832, %v836
        %v838 = vlaneseq
        %v839 = vshrl.u32 %v838, 7
        %v840 = vsub.s32 1, %v839
        %v841 = vrot.slane %v832, %v840
        %v842 = vlaneseq
        %v843 = vshrl.u32 %v842, 7
        %v844 = vsub.s32 2, %v843
        %v845 = vrot.slane %v832, %v844
        %v846 = vlaneseq
        %v847 = vshrl.u32 %v846, 7
        %v848 = vsub.s32 3, %v847
        %v849 = vrot.slane %v832, %v848
        %v854 = vmul.f32 %v641, %v837
        %v855 = vmul.f32 %v643, %v841
        %v856 = vmul.f32 %v754, %v845
        %v857 = vmul.f32 %v756, %v849
        %v858 = vmul.f32 %v645, %v837
        %v859 = vmul.f32 %v647, %v841
        %v860 = vmul.f32 %v758, %v845
        %v861 = vmul.f32 %v760, %v849
        %v862 = vmul.f32 %v651, %v837
        %v863 = vmul.f32 %v653, %v841
        %v864 = vmul.f32 %v764, %v845
        %v865 = vmul.f32 %v766, %v849
        %v866 = vmul.f32 %v655, %v837
        %v867 = vmul.f32 %v657, %v841
        %v868 = vmul.f32 %v768, %v845
        %v869 = vmul.f32 %v770, %v849
        %v870 = vmul.f32 %v661, %v837
        %v871 = vmul.f32 %v663, %v841
        %v872 = vmul.f32 %v774, %v845
        %v873 = vmul.f32 %v776, %v849
        %v874 = vmul.f32 %v665, %v837
        %v875 = vmul.f32 %v667, %v841
        %v876 = vmul.f32 %v778, %v845
        %v877 = vmul.f32 %v780, %v849
        %v878 = vmul.f32 %v671, %v837
        %v879 = vmul.f32 %v673, %v841
        %v880 = vmul.f32 %v784, %v845
        %v881 = vmul.f32 %v786, %v849
        %v882 = vmul.f32 %v675, %v837
        %v883 = vmul.f32 %v677, %v841
        %v884 = vmul.f32 %v788, %v845
        %v885 = vmul.f32 %v790, %v849
        %v886 = vmul.f32 %v681, %v837
        %v887 = vmul.f32 %v683, %v841
        %v888 = vmul.f32 %v794, %v845
        %v889 = vmul.f32 %v796, %v849
        %v890 = vmul.f32 %v685, %v837
        %v891 = vmul.f32 %v687, %v841
        %v892 = vmul.f32 %v798, %v845
        %v893 = vmul.f32 %v800, %v849
        %v894 = vmul.f32 %v691, %v837
        %v895 = vmul.f32 %v693, %v841
        %v896 = vmul.f32 %v804, %v845
        %v897 = vmul.f32 %v806, %v849
        %v898 = vmul.f32 %v695, %v837
        %v899 = vmul.f32 %v697, %v841
        %v900 = vmul.f32 %v808, %v845
        %v901 = vmul.f32 %v810, %v849
        %v902 = vmul.f32 %v701, %v837
        %v903 = vmul.f32 %v703, %v841
        %v904 = vmul.f32 %v814, %v845
        %v905 = vmul.f32 %v816, %v849
        %v906 = vmul.f32 %v705, %v837
        %v907 = vmul.f32 %v707, %v841
        %v908 = vmul.f32 %v818, %v845
        %v909 = vmul.f32 %v820, %v849
        %v910 = vmul.f32 %v711, %v837
        %v911 = vmul.f32 %v713, %v841
        %v912 = vmul.f32 %v824, %v845
        %v913 = vmul.f32 %v826, %v849
        %v914 = vmul.f32 %v715, %v837
        %v915 = vmul.f32 %v717, %v841
        %v916 = vmul.f32 %v828, %v845
        %v917 = vmul.f32 %v830, %v849
        %s918 = scalar_lea.vmem %s287, 256 [#allocation2]
        %v919 = vld [vmem:[%s918] sm:$0xff]
        %v920 = vld [vmem:[%s918 + $0x8] sm:$0xff]
        %v921 = vld [vmem:[%s918 + $0x10] sm:$0xff]
        %v922 = vld [vmem:[%s918 + $0x18] sm:$0xff]
        %v923 = vld [vmem:[%s918 + $0x20] sm:$0xff]
        %v924 = vld [vmem:[%s918 + $0x28] sm:$0xff]
        %v925 = vld [vmem:[%s918 + $0x30] sm:$0xff]
        %v926 = vld [vmem:[%s918 + $0x38] sm:$0xff]
        %v927 = vld [vmem:[%s918 + $0x40] sm:$0xff]
        %v928 = vld [vmem:[%s918 + $0x48] sm:$0xff]
        %v929 = vld [vmem:[%s918 + $0x50] sm:$0xff]
        %v930 = vld [vmem:[%s918 + $0x58] sm:$0xff]
        %v931 = vld [vmem:[%s918 + $0x60] sm:$0xff]
        %v932 = vld [vmem:[%s918 + $0x68] sm:$0xff]
        %v933 = vld [vmem:[%s918 + $0x70] sm:$0xff]
        %v934 = vld [vmem:[%s918 + $0x78] sm:$0xff]
        %v935 = vld [vmem:[%s918 + $0x80] sm:$0xff]
        %v936 = vld [vmem:[%s918 + $0x88] sm:$0xff]
        %v937 = vld [vmem:[%s918 + $0x90] sm:$0xff]
        %v938 = vld [vmem:[%s918 + $0x98] sm:$0xff]
        %v939 = vld [vmem:[%s918 + $0xa0] sm:$0xff]
        %v940 = vld [vmem:[%s918 + $0xa8] sm:$0xff]
        %v941 = vld [vmem:[%s918 + $0xb0] sm:$0xff]
        %v942 = vld [vmem:[%s918 + $0xb8] sm:$0xff]
        %v943 = vld [vmem:[%s918 + $0xc0] sm:$0xff]
        %v944 = vld [vmem:[%s918 + $0xc8] sm:$0xff]
        %v945 = vld [vmem:[%s918 + $0xd0] sm:$0xff]
        %v946 = vld [vmem:[%s918 + $0xd8] sm:$0xff]
        %v947 = vld [vmem:[%s918 + $0xe0] sm:$0xff]
        %v948 = vld [vmem:[%s918 + $0xe8] sm:$0xff]
        %v949 = vld [vmem:[%s918 + $0xf0] sm:$0xff]
        %v950 = vld [vmem:[%s918 + $0xf8] sm:$0xff]
        %v983 = vunpack.c.l.b16 %v919
        %v984 = vunpack.c.h.b16 %v919
        %v985 = vunpack.c.l.b16 %v920
        %v986 = vunpack.c.h.b16 %v920
        %v987 = vunpack.c.l.b16 %v921
        %v988 = vunpack.c.h.b16 %v921
        %v989 = vunpack.c.l.b16 %v922
        %v990 = vunpack.c.h.b16 %v922
        %v991 = vunpack.c.l.b16 %v923
        %v992 = vunpack.c.h.b16 %v923
        %v993 = vunpack.c.l.b16 %v924
        %v994 = vunpack.c.h.b16 %v924
        %v995 = vunpack.c.l.b16 %v925
        %v996 = vunpack.c.h.b16 %v925
        %v997 = vunpack.c.l.b16 %v926
        %v998 = vunpack.c.h.b16 %v926
        %v999 = vunpack.c.l.b16 %v927
        %v1000 = vunpack.c.h.b16 %v927
        %v1001 = vunpack.c.l.b16 %v928
        %v1002 = vunpack.c.h.b16 %v928
        %v1003 = vunpack.c.l.b16 %v929
        %v1004 = vunpack.c.h.b16 %v929
        %v1005 = vunpack.c.l.b16 %v930
        %v1006 = vunpack.c.h.b16 %v930
        %v1007 = vunpack.c.l.b16 %v931
        %v1008 = vunpack.c.h.b16 %v931
        %v1009 = vunpack.c.l.b16 %v932
        %v1010 = vunpack.c.h.b16 %v932
        %v1011 = vunpack.c.l.b16 %v933
        %v1012 = vunpack.c.h.b16 %v933
        %v1013 = vunpack.c.l.b16 %v934
        %v1014 = vunpack.c.h.b16 %v934
        %v1015 = vunpack.c.l.b16 %v935
        %v1016 = vunpack.c.h.b16 %v935
        %v1017 = vunpack.c.l.b16 %v936
        %v1018 = vunpack.c.h.b16 %v936
        %v1019 = vunpack.c.l.b16 %v937
        %v1020 = vunpack.c.h.b16 %v937
        %v1021 = vunpack.c.l.b16 %v938
        %v1022 = vunpack.c.h.b16 %v938
        %v1023 = vunpack.c.l.b16 %v939
        %v1024 = vunpack.c.h.b16 %v939
        %v1025 = vunpack.c.l.b16 %v940
        %v1026 = vunpack.c.h.b16 %v940
        %v1027 = vunpack.c.l.b16 %v941
        %v1028 = vunpack.c.h.b16 %v941
        %v1029 = vunpack.c.l.b16 %v942
        %v1030 = vunpack.c.h.b16 %v942
        %v1031 = vunpack.c.l.b16 %v943
        %v1032 = vunpack.c.h.b16 %v943
        %v1033 = vunpack.c.l.b16 %v944
        %v1034 = vunpack.c.h.b16 %v944
        %v1035 = vunpack.c.l.b16 %v945
        %v1036 = vunpack.c.h.b16 %v945
        %v1037 = vunpack.c.l.b16 %v946
        %v1038 = vunpack.c.h.b16 %v946
        %v1039 = vunpack.c.l.b16 %v947
        %v1040 = vunpack.c.h.b16 %v947
        %v1041 = vunpack.c.l.b16 %v948
        %v1042 = vunpack.c.h.b16 %v948
        %v1043 = vunpack.c.l.b16 %v949
        %v1044 = vunpack.c.h.b16 %v949
        %v1045 = vunpack.c.l.b16 %v950
        %v1046 = vunpack.c.h.b16 %v950
        %v1047 = vpack.c.b16 %v987, %v983
        %v1048 = vpack.c.b16 %v988, %v984
        %v1049 = vpack.c.b16 %v989, %v985
        %v1050 = vpack.c.b16 %v990, %v986
        %v1051 = vpack.c.b16 %v995, %v991
        %v1052 = vpack.c.b16 %v996, %v992
        %v1053 = vpack.c.b16 %v997, %v993
        %v1054 = vpack.c.b16 %v998, %v994
        %v1055 = vpack.c.b16 %v1003, %v999
        %v1056 = vpack.c.b16 %v1004, %v1000
        %v1057 = vpack.c.b16 %v1005, %v1001
        %v1058 = vpack.c.b16 %v1006, %v1002
        %v1059 = vpack.c.b16 %v1011, %v1007
        %v1060 = vpack.c.b16 %v1012, %v1008
        %v1061 = vpack.c.b16 %v1013, %v1009
        %v1062 = vpack.c.b16 %v1014, %v1010
        %v1063 = vpack.c.b16 %v1019, %v1015
        %v1064 = vpack.c.b16 %v1020, %v1016
        %v1065 = vpack.c.b16 %v1021, %v1017
        %v1066 = vpack.c.b16 %v1022, %v1018
        %v1067 = vpack.c.b16 %v1027, %v1023
        %v1068 = vpack.c.b16 %v1028, %v1024
        %v1069 = vpack.c.b16 %v1029, %v1025
        %v1070 = vpack.c.b16 %v1030, %v1026
        %v1071 = vpack.c.b16 %v1035, %v1031
        %v1072 = vpack.c.b16 %v1036, %v1032
        %v1073 = vpack.c.b16 %v1037, %v1033
        %v1074 = vpack.c.b16 %v1038, %v1034
        %v1075 = vpack.c.b16 %v1043, %v1039
        %v1076 = vpack.c.b16 %v1044, %v1040
        %v1077 = vpack.c.b16 %v1045, %v1041
        %v1078 = vpack.c.b16 %v1046, %v1042
        %1111 = vmatprep.subr.bf16.mxu0 %v1076
        %1112 = vmatpush1.bf16.msra.mxu0 %v1075
        %1113 = vmatprep.subr.bf16.mxu0 %v1072
        %1114 = vmatpush1.bf16.msra.mxu0 %v1071
        %1115 = vmatprep.subr.bf16.mxu0 %v1068
        %1116 = vmatpush1.bf16.msra.mxu0 %v1067
        %1117 = vmatprep.subr.bf16.mxu0 %v1064
        %1118 = vmatpush1.bf16.msra.mxu0 %v1063
        %1119 = vmatprep.subr.bf16.mxu0 %v1060
        %1120 = vmatpush1.bf16.msra.mxu0 %v1059
        %1121 = vmatprep.subr.bf16.mxu0 %v1056
        %1122 = vmatpush1.bf16.msra.mxu0 %v1055
        %1123 = vmatprep.subr.bf16.mxu0 %v1052
        %1124 = vmatpush1.bf16.msra.mxu0 %v1051
        %1125 = vmatprep.subr.bf16.mxu0 %v1048
        %1126 = vmatpush1.bf16.msra.mxu0 %v1047
        %1127 = vmatprep.subr.bf16.mxu0 0
        %1128 = vmatpush2.bf16.msra.mxu0 0
        %1129 = vmatprep.subr.bf16.mxu0 0
        %1130 = vmatpush2.bf16.msra.mxu0 0
        %1131 = vmatprep.subr.bf16.mxu0 0
        %1132 = vmatpush2.bf16.msra.mxu0 0
        %1133 = vmatprep.subr.bf16.mxu0 0
        %1134 = vmatpush2.bf16.msra.mxu0 0
        %1135 = vmatprep.subr.bf16.mxu0 0
        %1136 = vmatpush2.bf16.msra.mxu0 0
        %1137 = vmatprep.subr.bf16.mxu0 0
        %1138 = vmatpush2.bf16.msra.mxu0 0
        %1139 = vmatprep.subr.bf16.mxu0 0
        %1140 = vmatpush2.bf16.msra.mxu0 0
        %1141 = vmatprep.subr.bf16.mxu0 0
        %1142 = vmatpush2.bf16.msra.mxu0 0
        %1143 = vmatprep.mubr.bf16.mxu0 0
        %1144 = vmatmul.mubr.bf16.gmra.mxu0 %v430
        %v1145 = vpop.f32.mrf.mxu0
        %v1146 = vadd.f32 0.0, %v1145
        %v1147 = vpop.f32.mrf.mxu0
        %v1148 = vadd.f32 0.0, %v1147
        %v1149 = vpop.f32.mrf.mxu0
        %v1150 = vadd.f32 0.0, %v1149
        %v1151 = vpop.f32.mrf.mxu0
        %v1152 = vadd.f32 0.0, %v1151
        %1153 = vmatprep.mubr.bf16.mxu0 0
        %1154 = vmatmul.mubr.bf16.gmra.mxu0 %v431
        %v1155 = vpop.f32.mrf.mxu0
        %v1156 = vadd.f32 0.0, %v1155
        %v1157 = vpop.f32.mrf.mxu0
        %v1158 = vadd.f32 0.0, %v1157
        %v1159 = vpop.f32.mrf.mxu0
        %v1160 = vadd.f32 0.0, %v1159
        %v1161 = vpop.f32.mrf.mxu0
        %v1162 = vadd.f32 0.0, %v1161
        %1163 = vmatprep.mubr.bf16.mxu0 0
        %1164 = vmatmul.mubr.bf16.gmra.mxu0 %v432
        %v1165 = vpop.f32.mrf.mxu0
        %v1166 = vadd.f32 0.0, %v1165
        %v1167 = vpop.f32.mrf.mxu0
        %v1168 = vadd.f32 0.0, %v1167
        %v1169 = vpop.f32.mrf.mxu0
        %v1170 = vadd.f32 0.0, %v1169
        %v1171 = vpop.f32.mrf.mxu0
        %v1172 = vadd.f32 0.0, %v1171
        %1173 = vmatprep.mubr.bf16.mxu0 0
        %1174 = vmatmul.mubr.bf16.gmra.mxu0 %v433
        %v1175 = vpop.f32.mrf.mxu0
        %v1176 = vadd.f32 0.0, %v1175
        %v1177 = vpop.f32.mrf.mxu0
        %v1178 = vadd.f32 0.0, %v1177
        %v1179 = vpop.f32.mrf.mxu0
        %v1180 = vadd.f32 0.0, %v1179
        %v1181 = vpop.f32.mrf.mxu0
        %v1182 = vadd.f32 0.0, %v1181
        %1183 = vmatprep.mubr.bf16.mxu0 0
        %1184 = vmatmul.mubr.bf16.gmra.mxu0 %v434
        %v1185 = vpop.f32.mrf.mxu0
        %v1186 = vadd.f32 0.0, %v1185
        %v1187 = vpop.f32.mrf.mxu0
        %v1188 = vadd.f32 0.0, %v1187
        %v1189 = vpop.f32.mrf.mxu0
        %v1190 = vadd.f32 0.0, %v1189
        %v1191 = vpop.f32.mrf.mxu0
        %v1192 = vadd.f32 0.0, %v1191
        %1193 = vmatprep.mubr.bf16.mxu0 0
        %1194 = vmatmul.mubr.bf16.gmra.mxu0 %v435
        %v1195 = vpop.f32.mrf.mxu0
        %v1196 = vadd.f32 0.0, %v1195
        %v1197 = vpop.f32.mrf.mxu0
        %v1198 = vadd.f32 0.0, %v1197
        %v1199 = vpop.f32.mrf.mxu0
        %v1200 = vadd.f32 0.0, %v1199
        %v1201 = vpop.f32.mrf.mxu0
        %v1202 = vadd.f32 0.0, %v1201
        %1203 = vmatprep.mubr.bf16.mxu0 0
        %1204 = vmatmul.mubr.bf16.gmra.mxu0 %v436
        %v1205 = vpop.f32.mrf.mxu0
        %v1206 = vadd.f32 0.0, %v1205
        %v1207 = vpop.f32.mrf.mxu0
        %v1208 = vadd.f32 0.0, %v1207
        %v1209 = vpop.f32.mrf.mxu0
        %v1210 = vadd.f32 0.0, %v1209
        %v1211 = vpop.f32.mrf.mxu0
        %v1212 = vadd.f32 0.0, %v1211
        %1213 = vmatprep.mubr.bf16.mxu0 0
        %1214 = vmatmul.mubr.bf16.gmra.mxu0 %v437
        %v1215 = vpop.f32.mrf.mxu0
        %v1216 = vadd.f32 0.0, %v1215
        %v1217 = vpop.f32.mrf.mxu0
        %v1218 = vadd.f32 0.0, %v1217
        %v1219 = vpop.f32.mrf.mxu0
        %v1220 = vadd.f32 0.0, %v1219
        %v1221 = vpop.f32.mrf.mxu0
        %v1222 = vadd.f32 0.0, %v1221
        %1223 = vdwg.mxu0
        %1224 = vmatprep.subr.bf16.mxu0 %v1078
        %1225 = vmatpush1.bf16.msra.mxu0 %v1077
        %1226 = vmatprep.subr.bf16.mxu0 %v1074
        %1227 = vmatpush1.bf16.msra.mxu0 %v1073
        %1228 = vmatprep.subr.bf16.mxu0 %v1070
        %1229 = vmatpush1.bf16.msra.mxu0 %v1069
        %1230 = vmatprep.subr.bf16.mxu0 %v1066
        %1231 = vmatpush1.bf16.msra.mxu0 %v1065
        %1232 = vmatprep.subr.bf16.mxu0 %v1062
        %1233 = vmatpush1.bf16.msra.mxu0 %v1061
        %1234 = vmatprep.subr.bf16.mxu0 %v1058
        %1235 = vmatpush1.bf16.msra.mxu0 %v1057
        %1236 = vmatprep.subr.bf16.mxu0 %v1054
        %1237 = vmatpush1.bf16.msra.mxu0 %v1053
        %1238 = vmatprep.subr.bf16.mxu0 %v1050
        %1239 = vmatpush1.bf16.msra.mxu0 %v1049
        %1240 = vmatprep.subr.bf16.mxu0 0
        %1241 = vmatpush2.bf16.msra.mxu0 0
        %1242 = vmatprep.subr.bf16.mxu0 0
        %1243 = vmatpush2.bf16.msra.mxu0 0
        %1244 = vmatprep.subr.bf16.mxu0 0
        %1245 = vmatpush2.bf16.msra.mxu0 0
        %1246 = vmatprep.subr.bf16.mxu0 0
        %1247 = vmatpush2.bf16.msra.mxu0 0
        %1248 = vmatprep.subr.bf16.mxu0 0
        %1249 = vmatpush2.bf16.msra.mxu0 0
        %1250 = vmatprep.subr.bf16.mxu0 0
        %1251 = vmatpush2.bf16.msra.mxu0 0
        %1252 = vmatprep.subr.bf16.mxu0 0
        %1253 = vmatpush2.bf16.msra.mxu0 0
        %1254 = vmatprep.subr.bf16.mxu0 0
        %1255 = vmatpush2.bf16.msra.mxu0 0
        %1256 = vmatprep.mubr.bf16.mxu0 0
        %1257 = vmatmul.mubr.bf16.gmra.mxu0 %v430
        %v1258 = vpop.f32.mrf.mxu0
        %v1259 = vadd.f32 0.0, %v1258
        %v1260 = vpop.f32.mrf.mxu0
        %v1261 = vadd.f32 0.0, %v1260
        %v1262 = vpop.f32.mrf.mxu0
        %v1263 = vadd.f32 0.0, %v1262
        %v1264 = vpop.f32.mrf.mxu0
        %v1265 = vadd.f32 0.0, %v1264
        %1266 = vmatprep.mubr.bf16.mxu0 0
        %1267 = vmatmul.mubr.bf16.gmra.mxu0 %v431
        %v1268 = vpop.f32.mrf.mxu0
        %v1269 = vadd.f32 0.0, %v1268
        %v1270 = vpop.f32.mrf.mxu0
        %v1271 = vadd.f32 0.0, %v1270
        %v1272 = vpop.f32.mrf.mxu0
        %v1273 = vadd.f32 0.0, %v1272
        %v1274 = vpop.f32.mrf.mxu0
        %v1275 = vadd.f32 0.0, %v1274
        %1276 = vmatprep.mubr.bf16.mxu0 0
        %1277 = vmatmul.mubr.bf16.gmra.mxu0 %v432
        %v1278 = vpop.f32.mrf.mxu0
        %v1279 = vadd.f32 0.0, %v1278
        %v1280 = vpop.f32.mrf.mxu0
        %v1281 = vadd.f32 0.0, %v1280
        %v1282 = vpop.f32.mrf.mxu0
        %v1283 = vadd.f32 0.0, %v1282
        %v1284 = vpop.f32.mrf.mxu0
        %v1285 = vadd.f32 0.0, %v1284
        %1286 = vmatprep.mubr.bf16.mxu0 0
        %1287 = vmatmul.mubr.bf16.gmra.mxu0 %v433
        %v1288 = vpop.f32.mrf.mxu0
        %v1289 = vadd.f32 0.0, %v1288
        %v1290 = vpop.f32.mrf.mxu0
        %v1291 = vadd.f32 0.0, %v1290
        %v1292 = vpop.f32.mrf.mxu0
        %v1293 = vadd.f32 0.0, %v1292
        %v1294 = vpop.f32.mrf.mxu0
        %v1295 = vadd.f32 0.0, %v1294
        %1296 = vmatprep.mubr.bf16.mxu0 0
        %1297 = vmatmul.mubr.bf16.gmra.mxu0 %v434
        %v1298 = vpop.f32.mrf.mxu0
        %v1299 = vadd.f32 0.0, %v1298
        %v1300 = vpop.f32.mrf.mxu0
        %v1301 = vadd.f32 0.0, %v1300
        %v1302 = vpop.f32.mrf.mxu0
        %v1303 = vadd.f32 0.0, %v1302
        %v1304 = vpop.f32.mrf.mxu0
        %v1305 = vadd.f32 0.0, %v1304
        %1306 = vmatprep.mubr.bf16.mxu0 0
        %1307 = vmatmul.mubr.bf16.gmra.mxu0 %v435
        %v1308 = vpop.f32.mrf.mxu0
        %v1309 = vadd.f32 0.0, %v1308
        %v1310 = vpop.f32.mrf.mxu0
        %v1311 = vadd.f32 0.0, %v1310
        %v1312 = vpop.f32.mrf.mxu0
        %v1313 = vadd.f32 0.0, %v1312
        %v1314 = vpop.f32.mrf.mxu0
        %v1315 = vadd.f32 0.0, %v1314
        %1316 = vmatprep.mubr.bf16.mxu0 0
        %1317 = vmatmul.mubr.bf16.gmra.mxu0 %v436
        %v1318 = vpop.f32.mrf.mxu0
        %v1319 = vadd.f32 0.0, %v1318
        %v1320 = vpop.f32.mrf.mxu0
        %v1321 = vadd.f32 0.0, %v1320
        %v1322 = vpop.f32.mrf.mxu0
        %v1323 = vadd.f32 0.0, %v1322
        %v1324 = vpop.f32.mrf.mxu0
        %v1325 = vadd.f32 0.0, %v1324
        %1326 = vmatprep.mubr.bf16.mxu0 0
        %1327 = vmatmul.mubr.bf16.gmra.mxu0 %v437
        %v1328 = vpop.f32.mrf.mxu0
        %v1329 = vadd.f32 0.0, %v1328
        %v1330 = vpop.f32.mrf.mxu0
        %v1331 = vadd.f32 0.0, %v1330
        %v1332 = vpop.f32.mrf.mxu0
        %v1333 = vadd.f32 0.0, %v1332
        %v1334 = vpop.f32.mrf.mxu0
        %v1335 = vadd.f32 0.0, %v1334
        %1336 = vdwg.mxu0
        %s1337 = scalar_lea.vmem %s295, 4 [#allocation5]
        %v1338 = vld [vmem:[%s1337] sm:$0xf]
        %v1340 = vlaneseq
        %v1341 = vshrl.u32 %v1340, 7
        %v1342 = vsub.s32 0, %v1341
        %v1343 = vrot.slane %v1338, %v1342
        %v1344 = vlaneseq
        %v1345 = vshrl.u32 %v1344, 7
        %v1346 = vsub.s32 1, %v1345
        %v1347 = vrot.slane %v1338, %v1346
        %v1348 = vlaneseq
        %v1349 = vshrl.u32 %v1348, 7
        %v1350 = vsub.s32 2, %v1349
        %v1351 = vrot.slane %v1338, %v1350
        %v1352 = vlaneseq
        %v1353 = vshrl.u32 %v1352, 7
        %v1354 = vsub.s32 3, %v1353
        %v1355 = vrot.slane %v1338, %v1354
        %v1360 = vmul.f32 %v1146, %v1343
        %v1361 = vmul.f32 %v1148, %v1347
        %v1362 = vmul.f32 %v1259, %v1351
        %v1363 = vmul.f32 %v1261, %v1355
        %v1364 = vmul.f32 %v1150, %v1343
        %v1365 = vmul.f32 %v1152, %v1347
        %v1366 = vmul.f32 %v1263, %v1351
        %v1367 = vmul.f32 %v1265, %v1355
        %v1368 = vmul.f32 %v1156, %v1343
        %v1369 = vmul.f32 %v1158, %v1347
        %v1370 = vmul.f32 %v1269, %v1351
        %v1371 = vmul.f32 %v1271, %v1355
        %v1372 = vmul.f32 %v1160, %v1343
        %v1373 = vmul.f32 %v1162, %v1347
        %v1374 = vmul.f32 %v1273, %v1351
        %v1375 = vmul.f32 %v1275, %v1355
        %v1376 = vmul.f32 %v1166, %v1343
        %v1377 = vmul.f32 %v1168, %v1347
        %v1378 = vmul.f32 %v1279, %v1351
        %v1379 = vmul.f32 %v1281, %v1355
        %v1380 = vmul.f32 %v1170, %v1343
        %v1381 = vmul.f32 %v1172, %v1347
        %v1382 = vmul.f32 %v1283, %v1351
        %v1383 = vmul.f32 %v1285, %v1355
        %v1384 = vmul.f32 %v1176, %v1343
        %v1385 = vmul.f32 %v1178, %v1347
        %v1386 = vmul.f32 %v1289, %v1351
        %v1387 = vmul.f32 %v1291, %v1355
        %v1388 = vmul.f32 %v1180, %v1343
        %v1389 = vmul.f32 %v1182, %v1347
        %v1390 = vmul.f32 %v1293, %v1351
        %v1391 = vmul.f32 %v1295, %v1355
        %v1392 = vmul.f32 %v1186, %v1343
        %v1393 = vmul.f32 %v1188, %v1347
        %v1394 = vmul.f32 %v1299, %v1351
        %v1395 = vmul.f32 %v1301, %v1355
        %v1396 = vmul.f32 %v1190, %v1343
        %v1397 = vmul.f32 %v1192, %v1347
        %v1398 = vmul.f32 %v1303, %v1351
        %v1399 = vmul.f32 %v1305, %v1355
        %v1400 = vmul.f32 %v1196, %v1343
        %v1401 = vmul.f32 %v1198, %v1347
        %v1402 = vmul.f32 %v1309, %v1351
        %v1403 = vmul.f32 %v1311, %v1355
        %v1404 = vmul.f32 %v1200, %v1343
        %v1405 = vmul.f32 %v1202, %v1347
        %v1406 = vmul.f32 %v1313, %v1351
        %v1407 = vmul.f32 %v1315, %v1355
        %v1408 = vmul.f32 %v1206, %v1343
        %v1409 = vmul.f32 %v1208, %v1347
        %v1410 = vmul.f32 %v1319, %v1351
        %v1411 = vmul.f32 %v1321, %v1355
        %v1412 = vmul.f32 %v1210, %v1343
        %v1413 = vmul.f32 %v1212, %v1347
        %v1414 = vmul.f32 %v1323, %v1351
        %v1415 = vmul.f32 %v1325, %v1355
        %v1416 = vmul.f32 %v1216, %v1343
        %v1417 = vmul.f32 %v1218, %v1347
        %v1418 = vmul.f32 %v1329, %v1351
        %v1419 = vmul.f32 %v1331, %v1355
        %v1420 = vmul.f32 %v1220, %v1343
        %v1421 = vmul.f32 %v1222, %v1347
        %v1422 = vmul.f32 %v1333, %v1351
        %v1423 = vmul.f32 %v1335, %v1355
        %v1424 = vmax.f32 %v854, %v1360
        %v1425 = vmax.f32 %v855, %v1361
        %v1426 = vmax.f32 %v856, %v1362
        %v1427 = vmax.f32 %v857, %v1363
        %v1428 = vmax.f32 %v858, %v1364
        %v1429 = vmax.f32 %v859, %v1365
        %v1430 = vmax.f32 %v860, %v1366
        %v1431 = vmax.f32 %v861, %v1367
        %v1432 = vmax.f32 %v862, %v1368
        %v1433 = vmax.f32 %v863, %v1369
        %v1434 = vmax.f32 %v864, %v1370
        %v1435 = vmax.f32 %v865, %v1371
        %v1436 = vmax.f32 %v866, %v1372
        %v1437 = vmax.f32 %v867, %v1373
        %v1438 = vmax.f32 %v868, %v1374
        %v1439 = vmax.f32 %v869, %v1375
        %v1440 = vmax.f32 %v870, %v1376
        %v1441 = vmax.f32 %v871, %v1377
        %v1442 = vmax.f32 %v872, %v1378
        %v1443 = vmax.f32 %v873, %v1379
        %v1444 = vmax.f32 %v874, %v1380
        %v1445 = vmax.f32 %v875, %v1381
        %v1446 = vmax.f32 %v876, %v1382
        %v1447 = vmax.f32 %v877, %v1383
        %v1448 = vmax.f32 %v878, %v1384
        %v1449 = vmax.f32 %v879, %v1385
        %v1450 = vmax.f32 %v880, %v1386
        %v1451 = vmax.f32 %v881, %v1387
        %v1452 = vmax.f32 %v882, %v1388
        %v1453 = vmax.f32 %v883, %v1389
        %v1454 = vmax.f32 %v884, %v1390
        %v1455 = vmax.f32 %v885, %v1391
        %v1456 = vmax.f32 %v886, %v1392
        %v1457 = vmax.f32 %v887, %v1393
        %v1458 = vmax.f32 %v888, %v1394
        %v1459 = vmax.f32 %v889, %v1395
        %v1460 = vmax.f32 %v890, %v1396
        %v1461 = vmax.f32 %v891, %v1397
        %v1462 = vmax.f32 %v892, %v1398
        %v1463 = vmax.f32 %v893, %v1399
        %v1464 = vmax.f32 %v894, %v1400
        %v1465 = vmax.f32 %v895, %v1401
        %v1466 = vmax.f32 %v896, %v1402
        %v1467 = vmax.f32 %v897, %v1403
        %v1468 = vmax.f32 %v898, %v1404
        %v1469 = vmax.f32 %v899, %v1405
        %v1470 = vmax.f32 %v900, %v1406
        %v1471 = vmax.f32 %v901, %v1407
        %v1472 = vmax.f32 %v902, %v1408
        %v1473 = vmax.f32 %v903, %v1409
        %v1474 = vmax.f32 %v904, %v1410
        %v1475 = vmax.f32 %v905, %v1411
        %v1476 = vmax.f32 %v906, %v1412
        %v1477 = vmax.f32 %v907, %v1413
        %v1478 = vmax.f32 %v908, %v1414
        %v1479 = vmax.f32 %v909, %v1415
        %v1480 = vmax.f32 %v910, %v1416
        %v1481 = vmax.f32 %v911, %v1417
        %v1482 = vmax.f32 %v912, %v1418
        %v1483 = vmax.f32 %v913, %v1419
        %v1484 = vmax.f32 %v914, %v1420
        %v1485 = vmax.f32 %v915, %v1421
        %v1486 = vmax.f32 %v916, %v1422
        %v1487 = vmax.f32 %v917, %v1423
        %s1488 = scalar_lea.vmem %s287, 512 [#allocation2]
        %v1489 = vld [vmem:[%s1488] sm:$0xff]
        %v1490 = vld [vmem:[%s1488 + $0x8] sm:$0xff]
        %v1491 = vld [vmem:[%s1488 + $0x10] sm:$0xff]
        %v1492 = vld [vmem:[%s1488 + $0x18] sm:$0xff]
        %v1493 = vld [vmem:[%s1488 + $0x20] sm:$0xff]
        %v1494 = vld [vmem:[%s1488 + $0x28] sm:$0xff]
        %v1495 = vld [vmem:[%s1488 + $0x30] sm:$0xff]
        %v1496 = vld [vmem:[%s1488 + $0x38] sm:$0xff]
        %v1497 = vld [vmem:[%s1488 + $0x40] sm:$0xff]
        %v1498 = vld [vmem:[%s1488 + $0x48] sm:$0xff]
        %v1499 = vld [vmem:[%s1488 + $0x50] sm:$0xff]
        %v1500 = vld [vmem:[%s1488 + $0x58] sm:$0xff]
        %v1501 = vld [vmem:[%s1488 + $0x60] sm:$0xff]
        %v1502 = vld [vmem:[%s1488 + $0x68] sm:$0xff]
        %v1503 = vld [vmem:[%s1488 + $0x70] sm:$0xff]
        %v1504 = vld [vmem:[%s1488 + $0x78] sm:$0xff]
        %v1505 = vld [vmem:[%s1488 + $0x80] sm:$0xff]
        %v1506 = vld [vmem:[%s1488 + $0x88] sm:$0xff]
        %v1507 = vld [vmem:[%s1488 + $0x90] sm:$0xff]
        %v1508 = vld [vmem:[%s1488 + $0x98] sm:$0xff]
        %v1509 = vld [vmem:[%s1488 + $0xa0] sm:$0xff]
        %v1510 = vld [vmem:[%s1488 + $0xa8] sm:$0xff]
        %v1511 = vld [vmem:[%s1488 + $0xb0] sm:$0xff]
        %v1512 = vld [vmem:[%s1488 + $0xb8] sm:$0xff]
        %v1513 = vld [vmem:[%s1488 + $0xc0] sm:$0xff]
        %v1514 = vld [vmem:[%s1488 + $0xc8] sm:$0xff]
        %v1515 = vld [vmem:[%s1488 + $0xd0] sm:$0xff]
        %v1516 = vld [vmem:[%s1488 + $0xd8] sm:$0xff]
        %v1517 = vld [vmem:[%s1488 + $0xe0] sm:$0xff]
        %v1518 = vld [vmem:[%s1488 + $0xe8] sm:$0xff]
        %v1519 = vld [vmem:[%s1488 + $0xf0] sm:$0xff]
        %v1520 = vld [vmem:[%s1488 + $0xf8] sm:$0xff]
        %v1553 = vunpack.c.l.b16 %v1489
        %v1554 = vunpack.c.h.b16 %v1489
        %v1555 = vunpack.c.l.b16 %v1490
        %v1556 = vunpack.c.h.b16 %v1490
        %v1557 = vunpack.c.l.b16 %v1491
        %v1558 = vunpack.c.h.b16 %v1491
        %v1559 = vunpack.c.l.b16 %v1492
        %v1560 = vunpack.c.h.b16 %v1492
        %v1561 = vunpack.c.l.b16 %v1493
        %v1562 = vunpack.c.h.b16 %v1493
        %v1563 = vunpack.c.l.b16 %v1494
        %v1564 = vunpack.c.h.b16 %v1494
        %v1565 = vunpack.c.l.b16 %v1495
        %v1566 = vunpack.c.h.b16 %v1495
        %v1567 = vunpack.c.l.b16 %v1496
        %v1568 = vunpack.c.h.b16 %v1496
        %v1569 = vunpack.c.l.b16 %v1497
        %v1570 = vunpack.c.h.b16 %v1497
        %v1571 = vunpack.c.l.b16 %v1498
        %v1572 = vunpack.c.h.b16 %v1498
        %v1573 = vunpack.c.l.b16 %v1499
        %v1574 = vunpack.c.h.b16 %v1499
        %v1575 = vunpack.c.l.b16 %v1500
        %v1576 = vunpack.c.h.b16 %v1500
        %v1577 = vunpack.c.l.b16 %v1501
        %v1578 = vunpack.c.h.b16 %v1501
        %v1579 = vunpack.c.l.b16 %v1502
        %v1580 = vunpack.c.h.b16 %v1502
        %v1581 = vunpack.c.l.b16 %v1503
        %v1582 = vunpack.c.h.b16 %v1503
        %v1583 = vunpack.c.l.b16 %v1504
        %v1584 = vunpack.c.h.b16 %v1504
        %v1585 = vunpack.c.l.b16 %v1505
        %v1586 = vunpack.c.h.b16 %v1505
        %v1587 = vunpack.c.l.b16 %v1506
        %v1588 = vunpack.c.h.b16 %v1506
        %v1589 = vunpack.c.l.b16 %v1507
        %v1590 = vunpack.c.h.b16 %v1507
        %v1591 = vunpack.c.l.b16 %v1508
        %v1592 = vunpack.c.h.b16 %v1508
        %v1593 = vunpack.c.l.b16 %v1509
        %v1594 = vunpack.c.h.b16 %v1509
        %v1595 = vunpack.c.l.b16 %v1510
        %v1596 = vunpack.c.h.b16 %v1510
        %v1597 = vunpack.c.l.b16 %v1511
        %v1598 = vunpack.c.h.b16 %v1511
        %v1599 = vunpack.c.l.b16 %v1512
        %v1600 = vunpack.c.h.b16 %v1512
        %v1601 = vunpack.c.l.b16 %v1513
        %v1602 = vunpack.c.h.b16 %v1513
        %v1603 = vunpack.c.l.b16 %v1514
        %v1604 = vunpack.c.h.b16 %v1514
        %v1605 = vunpack.c.l.b16 %v1515
        %v1606 = vunpack.c.h.b16 %v1515
        %v1607 = vunpack.c.l.b16 %v1516
        %v1608 = vunpack.c.h.b16 %v1516
        %v1609 = vunpack.c.l.b16 %v1517
        %v1610 = vunpack.c.h.b16 %v1517
        %v1611 = vunpack.c.l.b16 %v1518
        %v1612 = vunpack.c.h.b16 %v1518
        %v1613 = vunpack.c.l.b16 %v1519
        %v1614 = vunpack.c.h.b16 %v1519
        %v1615 = vunpack.c.l.b16 %v1520
        %v1616 = vunpack.c.h.b16 %v1520
        %v1617 = vpack.c.b16 %v1557, %v1553
        %v1618 = vpack.c.b16 %v1558, %v1554
        %v1619 = vpack.c.b16 %v1559, %v1555
        %v1620 = vpack.c.b16 %v1560, %v1556
        %v1621 = vpack.c.b16 %v1565, %v1561
        %v1622 = vpack.c.b16 %v1566, %v1562
        %v1623 = vpack.c.b16 %v1567, %v1563
        %v1624 = vpack.c.b16 %v1568, %v1564
        %v1625 = vpack.c.b16 %v1573, %v1569
        %v1626 = vpack.c.b16 %v1574, %v1570
        %v1627 = vpack.c.b16 %v1575, %v1571
        %v1628 = vpack.c.b16 %v1576, %v1572
        %v1629 = vpack.c.b16 %v1581, %v1577
        %v1630 = vpack.c.b16 %v1582, %v1578
        %v1631 = vpack.c.b16 %v1583, %v1579
        %v1632 = vpack.c.b16 %v1584, %v1580
        %v1633 = vpack.c.b16 %v1589, %v1585
        %v1634 = vpack.c.b16 %v1590, %v1586
        %v1635 = vpack.c.b16 %v1591, %v1587
        %v1636 = vpack.c.b16 %v1592, %v1588
        %v1637 = vpack.c.b16 %v1597, %v1593
        %v1638 = vpack.c.b16 %v1598, %v1594
        %v1639 = vpack.c.b16 %v1599, %v1595
        %v1640 = vpack.c.b16 %v1600, %v1596
        %v1641 = vpack.c.b16 %v1605, %v1601
        %v1642 = vpack.c.b16 %v1606, %v1602
        %v1643 = vpack.c.b16 %v1607, %v1603
        %v1644 = vpack.c.b16 %v1608, %v1604
        %v1645 = vpack.c.b16 %v1613, %v1609
        %v1646 = vpack.c.b16 %v1614, %v1610
        %v1647 = vpack.c.b16 %v1615, %v1611
        %v1648 = vpack.c.b16 %v1616, %v1612
        %1681 = vmatprep.subr.bf16.mxu0 %v1646
        %1682 = vmatpush1.bf16.msra.mxu0 %v1645
        %1683 = vmatprep.subr.bf16.mxu0 %v1642
        %1684 = vmatpush1.bf16.msra.mxu0 %v1641
        %1685 = vmatprep.subr.bf16.mxu0 %v1638
        %1686 = vmatpush1.bf16.msra.mxu0 %v1637
        %1687 = vmatprep.subr.bf16.mxu0 %v1634
        %1688 = vmatpush1.bf16.msra.mxu0 %v1633
        %1689 = vmatprep.subr.bf16.mxu0 %v1630
        %1690 = vmatpush1.bf16.msra.mxu0 %v1629
        %1691 = vmatprep.subr.bf16.mxu0 %v1626
        %1692 = vmatpush1.bf16.msra.mxu0 %v1625
        %1693 = vmatprep.subr.bf16.mxu0 %v1622
        %1694 = vmatpush1.bf16.msra.mxu0 %v1621
        %1695 = vmatprep.subr.bf16.mxu0 %v1618
        %1696 = vmatpush1.bf16.msra.mxu0 %v1617
        %1697 = vmatprep.subr.bf16.mxu0 0
        %1698 = vmatpush2.bf16.msra.mxu0 0
        %1699 = vmatprep.subr.bf16.mxu0 0
        %1700 = vmatpush2.bf16.msra.mxu0 0
        %1701 = vmatprep.subr.bf16.mxu0 0
        %1702 = vmatpush2.bf16.msra.mxu0 0
        %1703 = vmatprep.subr.bf16.mxu0 0
        %1704 = vmatpush2.bf16.msra.mxu0 0
        %1705 = vmatprep.subr.bf16.mxu0 0
        %1706 = vmatpush2.bf16.msra.mxu0 0
        %1707 = vmatprep.subr.bf16.mxu0 0
        %1708 = vmatpush2.bf16.msra.mxu0 0
        %1709 = vmatprep.subr.bf16.mxu0 0
        %1710 = vmatpush2.bf16.msra.mxu0 0
        %1711 = vmatprep.subr.bf16.mxu0 0
        %1712 = vmatpush2.bf16.msra.mxu0 0
        %1713 = vmatprep.mubr.bf16.mxu0 0
        %1714 = vmatmul.mubr.bf16.gmra.mxu0 %v430
        %v1715 = vpop.f32.mrf.mxu0
        %v1716 = vadd.f32 0.0, %v1715
        %v1717 = vpop.f32.mrf.mxu0
        %v1718 = vadd.f32 0.0, %v1717
        %v1719 = vpop.f32.mrf.mxu0
        %v1720 = vadd.f32 0.0, %v1719
        %v1721 = vpop.f32.mrf.mxu0
        %v1722 = vadd.f32 0.0, %v1721
        %1723 = vmatprep.mubr.bf16.mxu0 0
        %1724 = vmatmul.mubr.bf16.gmra.mxu0 %v431
        %v1725 = vpop.f32.mrf.mxu0
        %v1726 = vadd.f32 0.0, %v1725
        %v1727 = vpop.f32.mrf.mxu0
        %v1728 = vadd.f32 0.0, %v1727
        %v1729 = vpop.f32.mrf.mxu0
        %v1730 = vadd.f32 0.0, %v1729
        %v1731 = vpop.f32.mrf.mxu0
        %v1732 = vadd.f32 0.0, %v1731
        %1733 = vmatprep.mubr.bf16.mxu0 0
        %1734 = vmatmul.mubr.bf16.gmra.mxu0 %v432
        %v1735 = vpop.f32.mrf.mxu0
        %v1736 = vadd.f32 0.0, %v1735
        %v1737 = vpop.f32.mrf.mxu0
        %v1738 = vadd.f32 0.0, %v1737
        %v1739 = vpop.f32.mrf.mxu0
        %v1740 = vadd.f32 0.0, %v1739
        %v1741 = vpop.f32.mrf.mxu0
        %v1742 = vadd.f32 0.0, %v1741
        %1743 = vmatprep.mubr.bf16.mxu0 0
        %1744 = vmatmul.mubr.bf16.gmra.mxu0 %v433
        %v1745 = vpop.f32.mrf.mxu0
        %v1746 = vadd.f32 0.0, %v1745
        %v1747 = vpop.f32.mrf.mxu0
        %v1748 = vadd.f32 0.0, %v1747
        %v1749 = vpop.f32.mrf.mxu0
        %v1750 = vadd.f32 0.0, %v1749
        %v1751 = vpop.f32.mrf.mxu0
        %v1752 = vadd.f32 0.0, %v1751
        %1753 = vmatprep.mubr.bf16.mxu0 0
        %1754 = vmatmul.mubr.bf16.gmra.mxu0 %v434
        %v1755 = vpop.f32.mrf.mxu0
        %v1756 = vadd.f32 0.0, %v1755
        %v1757 = vpop.f32.mrf.mxu0
        %v1758 = vadd.f32 0.0, %v1757
        %v1759 = vpop.f32.mrf.mxu0
        %v1760 = vadd.f32 0.0, %v1759
        %v1761 = vpop.f32.mrf.mxu0
        %v1762 = vadd.f32 0.0, %v1761
        %1763 = vmatprep.mubr.bf16.mxu0 0
        %1764 = vmatmul.mubr.bf16.gmra.mxu0 %v435
        %v1765 = vpop.f32.mrf.mxu0
        %v1766 = vadd.f32 0.0, %v1765
        %v1767 = vpop.f32.mrf.mxu0
        %v1768 = vadd.f32 0.0, %v1767
        %v1769 = vpop.f32.mrf.mxu0
        %v1770 = vadd.f32 0.0, %v1769
        %v1771 = vpop.f32.mrf.mxu0
        %v1772 = vadd.f32 0.0, %v1771
        %1773 = vmatprep.mubr.bf16.mxu0 0
        %1774 = vmatmul.mubr.bf16.gmra.mxu0 %v436
        %v1775 = vpop.f32.mrf.mxu0
        %v1776 = vadd.f32 0.0, %v1775
        %v1777 = vpop.f32.mrf.mxu0
        %v1778 = vadd.f32 0.0, %v1777
        %v1779 = vpop.f32.mrf.mxu0
        %v1780 = vadd.f32 0.0, %v1779
        %v1781 = vpop.f32.mrf.mxu0
        %v1782 = vadd.f32 0.0, %v1781
        %1783 = vmatprep.mubr.bf16.mxu0 0
        %1784 = vmatmul.mubr.bf16.gmra.mxu0 %v437
        %v1785 = vpop.f32.mrf.mxu0
        %v1786 = vadd.f32 0.0, %v1785
        %v1787 = vpop.f32.mrf.mxu0
        %v1788 = vadd.f32 0.0, %v1787
        %v1789 = vpop.f32.mrf.mxu0
        %v1790 = vadd.f32 0.0, %v1789
        %v1791 = vpop.f32.mrf.mxu0
        %v1792 = vadd.f32 0.0, %v1791
        %1793 = vdwg.mxu0
        %1794 = vmatprep.subr.bf16.mxu0 %v1648
        %1795 = vmatpush1.bf16.msra.mxu0 %v1647
        %1796 = vmatprep.subr.bf16.mxu0 %v1644
        %1797 = vmatpush1.bf16.msra.mxu0 %v1643
        %1798 = vmatprep.subr.bf16.mxu0 %v1640
        %1799 = vmatpush1.bf16.msra.mxu0 %v1639
        %1800 = vmatprep.subr.bf16.mxu0 %v1636
        %1801 = vmatpush1.bf16.msra.mxu0 %v1635
        %1802 = vmatprep.subr.bf16.mxu0 %v1632
        %1803 = vmatpush1.bf16.msra.mxu0 %v1631
        %1804 = vmatprep.subr.bf16.mxu0 %v1628
        %1805 = vmatpush1.bf16.msra.mxu0 %v1627
        %1806 = vmatprep.subr.bf16.mxu0 %v1624
        %1807 = vmatpush1.bf16.msra.mxu0 %v1623
        %1808 = vmatprep.subr.bf16.mxu0 %v1620
        %1809 = vmatpush1.bf16.msra.mxu0 %v1619
        %1810 = vmatprep.subr.bf16.mxu0 0
        %1811 = vmatpush2.bf16.msra.mxu0 0
        %1812 = vmatprep.subr.bf16.mxu0 0
        %1813 = vmatpush2.bf16.msra.mxu0 0
        %1814 = vmatprep.subr.bf16.mxu0 0
        %1815 = vmatpush2.bf16.msra.mxu0 0
        %1816 = vmatprep.subr.bf16.mxu0 0
        %1817 = vmatpush2.bf16.msra.mxu0 0
        %1818 = vmatprep.subr.bf16.mxu0 0
        %1819 = vmatpush2.bf16.msra.mxu0 0
        %1820 = vmatprep.subr.bf16.mxu0 0
        %1821 = vmatpush2.bf16.msra.mxu0 0
        %1822 = vmatprep.subr.bf16.mxu0 0
        %1823 = vmatpush2.bf16.msra.mxu0 0
        %1824 = vmatprep.subr.bf16.mxu0 0
        %1825 = vmatpush2.bf16.msra.mxu0 0
        %1826 = vmatprep.mubr.bf16.mxu0 0
        %1827 = vmatmul.mubr.bf16.gmra.mxu0 %v430
        %v1828 = vpop.f32.mrf.mxu0
        %v1829 = vadd.f32 0.0, %v1828
        %v1830 = vpop.f32.mrf.mxu0
        %v1831 = vadd.f32 0.0, %v1830
        %v1832 = vpop.f32.mrf.mxu0
        %v1833 = vadd.f32 0.0, %v1832
        %v1834 = vpop.f32.mrf.mxu0
        %v1835 = vadd.f32 0.0, %v1834
        %1836 = vmatprep.mubr.bf16.mxu0 0
        %1837 = vmatmul.mubr.bf16.gmra.mxu0 %v431
        %v1838 = vpop.f32.mrf.mxu0
        %v1839 = vadd.f32 0.0, %v1838
        %v1840 = vpop.f32.mrf.mxu0
        %v1841 = vadd.f32 0.0, %v1840
        %v1842 = vpop.f32.mrf.mxu0
        %v1843 = vadd.f32 0.0, %v1842
        %v1844 = vpop.f32.mrf.mxu0
        %v1845 = vadd.f32 0.0, %v1844
        %1846 = vmatprep.mubr.bf16.mxu0 0
        %1847 = vmatmul.mubr.bf16.gmra.mxu0 %v432
        %v1848 = vpop.f32.mrf.mxu0
        %v1849 = vadd.f32 0.0, %v1848
        %v1850 = vpop.f32.mrf.mxu0
        %v1851 = vadd.f32 0.0, %v1850
        %v1852 = vpop.f32.mrf.mxu0
        %v1853 = vadd.f32 0.0, %v1852
        %v1854 = vpop.f32.mrf.mxu0
        %v1855 = vadd.f32 0.0, %v1854
        %1856 = vmatprep.mubr.bf16.mxu0 0
        %1857 = vmatmul.mubr.bf16.gmra.mxu0 %v433
        %v1858 = vpop.f32.mrf.mxu0
        %v1859 = vadd.f32 0.0, %v1858
        %v1860 = vpop.f32.mrf.mxu0
        %v1861 = vadd.f32 0.0, %v1860
        %v1862 = vpop.f32.mrf.mxu0
        %v1863 = vadd.f32 0.0, %v1862
        %v1864 = vpop.f32.mrf.mxu0
        %v1865 = vadd.f32 0.0, %v1864
        %1866 = vmatprep.mubr.bf16.mxu0 0
        %1867 = vmatmul.mubr.bf16.gmra.mxu0 %v434
        %v1868 = vpop.f32.mrf.mxu0
        %v1869 = vadd.f32 0.0, %v1868
        %v1870 = vpop.f32.mrf.mxu0
        %v1871 = vadd.f32 0.0, %v1870
        %v1872 = vpop.f32.mrf.mxu0
        %v1873 = vadd.f32 0.0, %v1872
        %v1874 = vpop.f32.mrf.mxu0
        %v1875 = vadd.f32 0.0, %v1874
        %1876 = vmatprep.mubr.bf16.mxu0 0
        %1877 = vmatmul.mubr.bf16.gmra.mxu0 %v435
        %v1878 = vpop.f32.mrf.mxu0
        %v1879 = vadd.f32 0.0, %v1878
        %v1880 = vpop.f32.mrf.mxu0
        %v1881 = vadd.f32 0.0, %v1880
        %v1882 = vpop.f32.mrf.mxu0
        %v1883 = vadd.f32 0.0, %v1882
        %v1884 = vpop.f32.mrf.mxu0
        %v1885 = vadd.f32 0.0, %v1884
        %1886 = vmatprep.mubr.bf16.mxu0 0
        %1887 = vmatmul.mubr.bf16.gmra.mxu0 %v436
        %v1888 = vpop.f32.mrf.mxu0
        %v1889 = vadd.f32 0.0, %v1888
        %v1890 = vpop.f32.mrf.mxu0
        %v1891 = vadd.f32 0.0, %v1890
        %v1892 = vpop.f32.mrf.mxu0
        %v1893 = vadd.f32 0.0, %v1892
        %v1894 = vpop.f32.mrf.mxu0
        %v1895 = vadd.f32 0.0, %v1894
        %1896 = vmatprep.mubr.bf16.mxu0 0
        %1897 = vmatmul.mubr.bf16.gmra.mxu0 %v437
        %v1898 = vpop.f32.mrf.mxu0
        %v1899 = vadd.f32 0.0, %v1898
        %v1900 = vpop.f32.mrf.mxu0
        %v1901 = vadd.f32 0.0, %v1900
        %v1902 = vpop.f32.mrf.mxu0
        %v1903 = vadd.f32 0.0, %v1902
        %v1904 = vpop.f32.mrf.mxu0
        %v1905 = vadd.f32 0.0, %v1904
        %1906 = vdwg.mxu0
        %s1907 = scalar_lea.vmem %s295, 8 [#allocation5]
        %v1908 = vld [vmem:[%s1907] sm:$0xf]
        %v1910 = vlaneseq
        %v1911 = vshrl.u32 %v1910, 7
        %v1912 = vsub.s32 0, %v1911
        %v1913 = vrot.slane %v1908, %v1912
        %v1914 = vlaneseq
        %v1915 = vshrl.u32 %v1914, 7
        %v1916 = vsub.s32 1, %v1915
        %v1917 = vrot.slane %v1908, %v1916
        %v1918 = vlaneseq
        %v1919 = vshrl.u32 %v1918, 7
        %v1920 = vsub.s32 2, %v1919
        %v1921 = vrot.slane %v1908, %v1920
        %v1922 = vlaneseq
        %v1923 = vshrl.u32 %v1922, 7
        %v1924 = vsub.s32 3, %v1923
        %v1925 = vrot.slane %v1908, %v1924
        %v1930 = vmul.f32 %v1716, %v1913
        %v1931 = vmul.f32 %v1718, %v1917
        %v1932 = vmul.f32 %v1829, %v1921
        %v1933 = vmul.f32 %v1831, %v1925
        %v1934 = vmul.f32 %v1720, %v1913
        %v1935 = vmul.f32 %v1722, %v1917
        %v1936 = vmul.f32 %v1833, %v1921
        %v1937 = vmul.f32 %v1835, %v1925
        %v1938 = vmul.f32 %v1726, %v1913
        %v1939 = vmul.f32 %v1728, %v1917
        %v1940 = vmul.f32 %v1839, %v1921
        %v1941 = vmul.f32 %v1841, %v1925
        %v1942 = vmul.f32 %v1730, %v1913
        %v1943 = vmul.f32 %v1732, %v1917
        %v1944 = vmul.f32 %v1843, %v1921
        %v1945 = vmul.f32 %v1845, %v1925
        %v1946 = vmul.f32 %v1736, %v1913
        %v1947 = vmul.f32 %v1738, %v1917
        %v1948 = vmul.f32 %v1849, %v1921
        %v1949 = vmul.f32 %v1851, %v1925
        %v1950 = vmul.f32 %v1740, %v1913
        %v1951 = vmul.f32 %v1742, %v1917
        %v1952 = vmul.f32 %v1853, %v1921
        %v1953 = vmul.f32 %v1855, %v1925
        %v1954 = vmul.f32 %v1746, %v1913
        %v1955 = vmul.f32 %v1748, %v1917
        %v1956 = vmul.f32 %v1859, %v1921
        %v1957 = vmul.f32 %v1861, %v1925
        %v1958 = vmul.f32 %v1750, %v1913
        %v1959 = vmul.f32 %v1752, %v1917
        %v1960 = vmul.f32 %v1863, %v1921
        %v1961 = vmul.f32 %v1865, %v1925
        %v1962 = vmul.f32 %v1756, %v1913
        %v1963 = vmul.f32 %v1758, %v1917
        %v1964 = vmul.f32 %v1869, %v1921
        %v1965 = vmul.f32 %v1871, %v1925
        %v1966 = vmul.f32 %v1760, %v1913
        %v1967 = vmul.f32 %v1762, %v1917
        %v1968 = vmul.f32 %v1873, %v1921
        %v1969 = vmul.f32 %v1875, %v1925
        %v1970 = vmul.f32 %v1766, %v1913
        %v1971 = vmul.f32 %v1768, %v1917
        %v1972 = vmul.f32 %v1879, %v1921
        %v1973 = vmul.f32 %v1881, %v1925
        %v1974 = vmul.f32 %v1770, %v1913
        %v1975 = vmul.f32 %v1772, %v1917
        %v1976 = vmul.f32 %v1883, %v1921
        %v1977 = vmul.f32 %v1885, %v1925
        %v1978 = vmul.f32 %v1776, %v1913
        %v1979 = vmul.f32 %v1778, %v1917
        %v1980 = vmul.f32 %v1889, %v1921
        %v1981 = vmul.f32 %v1891, %v1925
        %v1982 = vmul.f32 %v1780, %v1913
        %v1983 = vmul.f32 %v1782, %v1917
        %v1984 = vmul.f32 %v1893, %v1921
        %v1985 = vmul.f32 %v1895, %v1925
        %v1986 = vmul.f32 %v1786, %v1913
        %v1987 = vmul.f32 %v1788, %v1917
        %v1988 = vmul.f32 %v1899, %v1921
        %v1989 = vmul.f32 %v1901, %v1925
        %v1990 = vmul.f32 %v1790, %v1913
        %v1991 = vmul.f32 %v1792, %v1917
        %v1992 = vmul.f32 %v1903, %v1921
        %v1993 = vmul.f32 %v1905, %v1925
        %v1994 = vmax.f32 %v1424, %v1930
        %v1995 = vmax.f32 %v1425, %v1931
        %v1996 = vmax.f32 %v1426, %v1932
        %v1997 = vmax.f32 %v1427, %v1933
        %v1998 = vmax.f32 %v1428, %v1934
        %v1999 = vmax.f32 %v1429, %v1935
        %v2000 = vmax.f32 %v1430, %v1936
        %v2001 = vmax.f32 %v1431, %v1937
        %v2002 = vmax.f32 %v1432, %v1938
        %v2003 = vmax.f32 %v1433, %v1939
        %v2004 = vmax.f32 %v1434, %v1940
        %v2005 = vmax.f32 %v1435, %v1941
        %v2006 = vmax.f32 %v1436, %v1942
        %v2007 = vmax.f32 %v1437, %v1943
        %v2008 = vmax.f32 %v1438, %v1944
        %v2009 = vmax.f32 %v1439, %v1945
        %v2010 = vmax.f32 %v1440, %v1946
        %v2011 = vmax.f32 %v1441, %v1947
        %v2012 = vmax.f32 %v1442, %v1948
        %v2013 = vmax.f32 %v1443, %v1949
        %v2014 = vmax.f32 %v1444, %v1950
        %v2015 = vmax.f32 %v1445, %v1951
        %v2016 = vmax.f32 %v1446, %v1952
        %v2017 = vmax.f32 %v1447, %v1953
        %v2018 = vmax.f32 %v1448, %v1954
        %v2019 = vmax.f32 %v1449, %v1955
        %v2020 = vmax.f32 %v1450, %v1956
        %v2021 = vmax.f32 %v1451, %v1957
        %v2022 = vmax.f32 %v1452, %v1958
        %v2023 = vmax.f32 %v1453, %v1959
        %v2024 = vmax.f32 %v1454, %v1960
        %v2025 = vmax.f32 %v1455, %v1961
        %v2026 = vmax.f32 %v1456, %v1962
        %v2027 = vmax.f32 %v1457, %v1963
        %v2028 = vmax.f32 %v1458, %v1964
        %v2029 = vmax.f32 %v1459, %v1965
        %v2030 = vmax.f32 %v1460, %v1966
        %v2031 = vmax.f32 %v1461, %v1967
        %v2032 = vmax.f32 %v1462, %v1968
        %v2033 = vmax.f32 %v1463, %v1969
        %v2034 = vmax.f32 %v1464, %v1970
        %v2035 = vmax.f32 %v1465, %v1971
        %v2036 = vmax.f32 %v1466, %v1972
        %v2037 = vmax.f32 %v1467, %v1973
        %v2038 = vmax.f32 %v1468, %v1974
        %v2039 = vmax.f32 %v1469, %v1975
        %v2040 = vmax.f32 %v1470, %v1976
        %v2041 = vmax.f32 %v1471, %v1977
        %v2042 = vmax.f32 %v1472, %v1978
        %v2043 = vmax.f32 %v1473, %v1979
        %v2044 = vmax.f32 %v1474, %v1980
        %v2045 = vmax.f32 %v1475, %v1981
        %v2046 = vmax.f32 %v1476, %v1982
        %v2047 = vmax.f32 %v1477, %v1983
        %v2048 = vmax.f32 %v1478, %v1984
        %v2049 = vmax.f32 %v1479, %v1985
        %v2050 = vmax.f32 %v1480, %v1986
        %v2051 = vmax.f32 %v1481, %v1987
        %v2052 = vmax.f32 %v1482, %v1988
        %v2053 = vmax.f32 %v1483, %v1989
        %v2054 = vmax.f32 %v1484, %v1990
        %v2055 = vmax.f32 %v1485, %v1991
        %v2056 = vmax.f32 %v1486, %v1992
        %v2057 = vmax.f32 %v1487, %v1993
        %v2058 = vld [vmem:[%s344] sm:$0xff]
        %v2059 = vld [vmem:[%s344 + $0x8] sm:$0xff]
        %v2060 = vld [vmem:[%s344 + $0x10] sm:$0xff]
        %v2061 = vld [vmem:[%s344 + $0x18] sm:$0xff]
        %v2062 = vld [vmem:[%s344 + $0x20] sm:$0xff]
        %v2063 = vld [vmem:[%s344 + $0x28] sm:$0xff]
        %v2064 = vld [vmem:[%s344 + $0x30] sm:$0xff]
        %v2065 = vld [vmem:[%s344 + $0x38] sm:$0xff]
        %v2066 = vld [vmem:[%s344 + $0x40] sm:$0xff]
        %v2067 = vld [vmem:[%s344 + $0x48] sm:$0xff]
        %v2068 = vld [vmem:[%s344 + $0x50] sm:$0xff]
        %v2069 = vld [vmem:[%s344 + $0x58] sm:$0xff]
        %v2070 = vld [vmem:[%s344 + $0x60] sm:$0xff]
        %v2071 = vld [vmem:[%s344 + $0x68] sm:$0xff]
        %v2072 = vld [vmem:[%s344 + $0x70] sm:$0xff]
        %v2073 = vld [vmem:[%s344 + $0x78] sm:$0xff]
        %2075 = vset.pattern.permute.xlu0 0
        %2076 = vperm.xlu0 %2075, %v2058
        %v2077 = vpop.permute.xlu0 %2076
        %2080 = vset.pattern.permute.xlu0 0
        %2081 = vperm.xlu0 %2080, %v2059
        %v2082 = vpop.permute.xlu0 %2081
        %2085 = vset.pattern.permute.xlu0 0
        %2086 = vperm.xlu0 %2085, %v2060
        %v2087 = vpop.permute.xlu0 %2086
        %2090 = vset.pattern.permute.xlu0 0
        %2091 = vperm.xlu0 %2090, %v2061
        %v2092 = vpop.permute.xlu0 %2091
        %2095 = vset.pattern.permute.xlu0 0
        %2096 = vperm.xlu0 %2095, %v2062
        %v2097 = vpop.permute.xlu0 %2096
        %2100 = vset.pattern.permute.xlu0 0
        %2101 = vperm.xlu0 %2100, %v2063
        %v2102 = vpop.permute.xlu0 %2101
        %2105 = vset.pattern.permute.xlu0 0
        %2106 = vperm.xlu0 %2105, %v2064
        %v2107 = vpop.permute.xlu0 %2106
        %2110 = vset.pattern.permute.xlu0 0
        %2111 = vperm.xlu0 %2110, %v2065
        %v2112 = vpop.permute.xlu0 %2111
        %2115 = vset.pattern.permute.xlu0 0
        %2116 = vperm.xlu0 %2115, %v2066
        %v2117 = vpop.permute.xlu0 %2116
        %2120 = vset.pattern.permute.xlu0 0
        %2121 = vperm.xlu0 %2120, %v2067
        %v2122 = vpop.permute.xlu0 %2121
        %2125 = vset.pattern.permute.xlu0 0
        %2126 = vperm.xlu0 %2125, %v2068
        %v2127 = vpop.permute.xlu0 %2126
        %2130 = vset.pattern.permute.xlu0 0
        %2131 = vperm.xlu0 %2130, %v2069
        %v2132 = vpop.permute.xlu0 %2131
        %2135 = vset.pattern.permute.xlu0 0
        %2136 = vperm.xlu0 %2135, %v2070
        %v2137 = vpop.permute.xlu0 %2136
        %2140 = vset.pattern.permute.xlu0 0
        %2141 = vperm.xlu0 %2140, %v2071
        %v2142 = vpop.permute.xlu0 %2141
        %2145 = vset.pattern.permute.xlu0 0
        %2146 = vperm.xlu0 %2145, %v2072
        %v2147 = vpop.permute.xlu0 %2146
        %2150 = vset.pattern.permute.xlu0 0
        %2151 = vperm.xlu0 %2150, %v2073
        %v2152 = vpop.permute.xlu0 %2151
        %v2154 = vmul.f32 %v1994, %v2077
        %v2155 = vmul.f32 %v1995, %v2077
        %v2156 = vmul.f32 %v1996, %v2077
        %v2157 = vmul.f32 %v1997, %v2077
        %v2158 = vmul.f32 %v1998, %v2082
        %v2159 = vmul.f32 %v1999, %v2082
        %v2160 = vmul.f32 %v2000, %v2082
        %v2161 = vmul.f32 %v2001, %v2082
        %v2162 = vmul.f32 %v2002, %v2087
        %v2163 = vmul.f32 %v2003, %v2087
        %v2164 = vmul.f32 %v2004, %v2087
        %v2165 = vmul.f32 %v2005, %v2087
        %v2166 = vmul.f32 %v2006, %v2092
        %v2167 = vmul.f32 %v2007, %v2092
        %v2168 = vmul.f32 %v2008, %v2092
        %v2169 = vmul.f32 %v2009, %v2092
        %v2170 = vmul.f32 %v2010, %v2097
        %v2171 = vmul.f32 %v2011, %v2097
        %v2172 = vmul.f32 %v2012, %v2097
        %v2173 = vmul.f32 %v2013, %v2097
        %v2174 = vmul.f32 %v2014, %v2102
        %v2175 = vmul.f32 %v2015, %v2102
        %v2176 = vmul.f32 %v2016, %v2102
        %v2177 = vmul.f32 %v2017, %v2102
        %v2178 = vmul.f32 %v2018, %v2107
        %v2179 = vmul.f32 %v2019, %v2107
        %v2180 = vmul.f32 %v2020, %v2107
        %v2181 = vmul.f32 %v2021, %v2107
        %v2182 = vmul.f32 %v2022, %v2112
        %v2183 = vmul.f32 %v2023, %v2112
        %v2184 = vmul.f32 %v2024, %v2112
        %v2185 = vmul.f32 %v2025, %v2112
        %v2186 = vmul.f32 %v2026, %v2117
        %v2187 = vmul.f32 %v2027, %v2117
        %v2188 = vmul.f32 %v2028, %v2117
        %v2189 = vmul.f32 %v2029, %v2117
        %v2190 = vmul.f32 %v2030, %v2122
        %v2191 = vmul.f32 %v2031, %v2122
        %v2192 = vmul.f32 %v2032, %v2122
        %v2193 = vmul.f32 %v2033, %v2122
        %v2194 = vmul.f32 %v2034, %v2127
        %v2195 = vmul.f32 %v2035, %v2127
        %v2196 = vmul.f32 %v2036, %v2127
        %v2197 = vmul.f32 %v2037, %v2127
        %v2198 = vmul.f32 %v2038, %v2132
        %v2199 = vmul.f32 %v2039, %v2132
        %v2200 = vmul.f32 %v2040, %v2132
        %v2201 = vmul.f32 %v2041, %v2132
        %v2202 = vmul.f32 %v2042, %v2137
        %v2203 = vmul.f32 %v2043, %v2137
        %v2204 = vmul.f32 %v2044, %v2137
        %v2205 = vmul.f32 %v2045, %v2137
        %v2206 = vmul.f32 %v2046, %v2142
        %v2207 = vmul.f32 %v2047, %v2142
        %v2208 = vmul.f32 %v2048, %v2142
        %v2209 = vmul.f32 %v2049, %v2142
        %v2210 = vmul.f32 %v2050, %v2147
        %v2211 = vmul.f32 %v2051, %v2147
        %v2212 = vmul.f32 %v2052, %v2147
        %v2213 = vmul.f32 %v2053, %v2147
        %v2214 = vmul.f32 %v2054, %v2152
        %v2215 = vmul.f32 %v2055, %v2152
        %v2216 = vmul.f32 %v2056, %v2152
        %v2217 = vmul.f32 %v2057, %v2152
        %2218 = vst [vmem:[%s332] sm:$0xff] %v2154
        %2219 = vst [vmem:[%s332 + $0x8] sm:$0xff] %v2155
        %2220 = vst [vmem:[%s332 + $0x10] sm:$0xff] %v2156
        %2221 = vst [vmem:[%s332 + $0x18] sm:$0xff] %v2157
        %2222 = vst [vmem:[%s332 + $0x20] sm:$0xff] %v2158
        %2223 = vst [vmem:[%s332 + $0x28] sm:$0xff] %v2159
        %2224 = vst [vmem:[%s332 + $0x30] sm:$0xff] %v2160
        %2225 = vst [vmem:[%s332 + $0x38] sm:$0xff] %v2161
        %2226 = vst [vmem:[%s332 + $0x40] sm:$0xff] %v2162
        %2227 = vst [vmem:[%s332 + $0x48] sm:$0xff] %v2163
        %2228 = vst [vmem:[%s332 + $0x50] sm:$0xff] %v2164
        %2229 = vst [vmem:[%s332 + $0x58] sm:$0xff] %v2165
        %2230 = vst [vmem:[%s332 + $0x60] sm:$0xff] %v2166
        %2231 = vst [vmem:[%s332 + $0x68] sm:$0xff] %v2167
        %2232 = vst [vmem:[%s332 + $0x70] sm:$0xff] %v2168
        %2233 = vst [vmem:[%s332 + $0x78] sm:$0xff] %v2169
        %2234 = vst [vmem:[%s332 + $0x80] sm:$0xff] %v2170
        %2235 = vst [vmem:[%s332 + $0x88] sm:$0xff] %v2171
        %2236 = vst [vmem:[%s332 + $0x90] sm:$0xff] %v2172
        %2237 = vst [vmem:[%s332 + $0x98] sm:$0xff] %v2173
        %2238 = vst [vmem:[%s332 + $0xa0] sm:$0xff] %v2174
        %2239 = vst [vmem:[%s332 + $0xa8] sm:$0xff] %v2175
        %2240 = vst [vmem:[%s332 + $0xb0] sm:$0xff] %v2176
        %2241 = vst [vmem:[%s332 + $0xb8] sm:$0xff] %v2177
        %2242 = vst [vmem:[%s332 + $0xc0] sm:$0xff] %v2178
        %2243 = vst [vmem:[%s332 + $0xc8] sm:$0xff] %v2179
        %2244 = vst [vmem:[%s332 + $0xd0] sm:$0xff] %v2180
        %2245 = vst [vmem:[%s332 + $0xd8] sm:$0xff] %v2181
        %2246 = vst [vmem:[%s332 + $0xe0] sm:$0xff] %v2182
        %2247 = vst [vmem:[%s332 + $0xe8] sm:$0xff] %v2183
        %2248 = vst [vmem:[%s332 + $0xf0] sm:$0xff] %v2184
        %2249 = vst [vmem:[%s332 + $0xf8] sm:$0xff] %v2185
        %2250 = vst [vmem:[%s332 + $0x100] sm:$0xff] %v2186
        %2251 = vst [vmem:[%s332 + $0x108] sm:$0xff] %v2187
        %2252 = vst [vmem:[%s332 + $0x110] sm:$0xff] %v2188
        %2253 = vst [vmem:[%s332 + $0x118] sm:$0xff] %v2189
        %2254 = vst [vmem:[%s332 + $0x120] sm:$0xff] %v2190
        %2255 = vst [vmem:[%s332 + $0x128] sm:$0xff] %v2191
        %2256 = vst [vmem:[%s332 + $0x130] sm:$0xff] %v2192
        %2257 = vst [vmem:[%s332 + $0x138] sm:$0xff] %v2193
        %2258 = vst [vmem:[%s332 + $0x140] sm:$0xff] %v2194
        %2259 = vst [vmem:[%s332 + $0x148] sm:$0xff] %v2195
        %2260 = vst [vmem:[%s332 + $0x150] sm:$0xff] %v2196
        %2261 = vst [vmem:[%s332 + $0x158] sm:$0xff] %v2197
        %2262 = vst [vmem:[%s332 + $0x160] sm:$0xff] %v2198
        %2263 = vst [vmem:[%s332 + $0x168] sm:$0xff] %v2199
        %2264 = vst [vmem:[%s332 + $0x170] sm:$0xff] %v2200
        %2265 = vst [vmem:[%s332 + $0x178] sm:$0xff] %v2201
        %2266 = vst [vmem:[%s332 + $0x180] sm:$0xff] %v2202
        %2267 = vst [vmem:[%s332 + $0x188] sm:$0xff] %v2203
        %2268 = vst [vmem:[%s332 + $0x190] sm:$0xff] %v2204
        %2269 = vst [vmem:[%s332 + $0x198] sm:$0xff] %v2205
        %2270 = vst [vmem:[%s332 + $0x1a0] sm:$0xff] %v2206
        %2271 = vst [vmem:[%s332 + $0x1a8] sm:$0xff] %v2207
        %2272 = vst [vmem:[%s332 + $0x1b0] sm:$0xff] %v2208
        %2273 = vst [vmem:[%s332 + $0x1b8] sm:$0xff] %v2209
        %2274 = vst [vmem:[%s332 + $0x1c0] sm:$0xff] %v2210
        %2275 = vst [vmem:[%s332 + $0x1c8] sm:$0xff] %v2211
        %2276 = vst [vmem:[%s332 + $0x1d0] sm:$0xff] %v2212
        %2277 = vst [vmem:[%s332 + $0x1d8] sm:$0xff] %v2213
        %2278 = vst [vmem:[%s332 + $0x1e0] sm:$0xff] %v2214
        %2279 = vst [vmem:[%s332 + $0x1e8] sm:$0xff] %v2215
        %2280 = vst [vmem:[%s332 + $0x1f0] sm:$0xff] %v2216
        %2281 = vst [vmem:[%s332 + $0x1f8] sm:$0xff] %v2217
        %s2282 = sand.u32 %s147, 1
        %s2283 = scalar_lea.sflag [#allocation4], %s2282
        %s2284 = sand.u32 %s147, 1
        %s2285 = smul.addr %s2284, 512
        %s2286 = scalar_lea.vmem [#allocation6], %s2285
        // Predicated region
        $region82: #{tpu_custom_call.1} parent=72 // pred_check
          %p2287 = pneg %p157
        $region83: #{tpu_custom_call.1} parent=72 // pred_check_branch
          %2289 = sbr.rel (%p2287) target = $region85
        $region84: #{tpu_custom_call.1} parent=72 // pred_region
          %s2290 = smul.u32 16, %s25
          %s2291 = smul.u32 4, %s26
          %s2293 = ssub.s32 8192, 8192
          %2294 = vsyncadd %s2283, %s2293
          %s2295 = smul.addr %s2290, 8
          %s2296 = sadd.s32 %s2291, %s2295
          %s2297 = smul.addr %s2296, 128
          %s2298 = scalar_lea.hbm %s4, %s2297
          %s2299 = sshll.u32 %s2286, 4
          %s2300 = int_to_ptr.vmem [resolvable:$true] %s2299
          %2305 = dma.vmem_to_hbm [thread:$0]  %s2300, 8192, %s2298, %s2283, 512, 1024, 32
        $region85: #{tpu_custom_call.1} parent=72 // pred_fallthru
          _
      $region73: #{tpu_custom_call.1} parent=5 // pred_fallthru
        _
      %p2306 = scmp.le.s32.totalorder 2, %s16
      // Predicated region
      $region86: #{tpu_custom_call.1} parent=5 // pred_check
        %p2307 = pneg %p2306
      $region87: #{tpu_custom_call.1} parent=5 // pred_check_branch
        %2309 = sbr.rel (%p2307) target = $region89
      $region88: #{tpu_custom_call.1} parent=5 // pred_region
        %s2310 = ssub.s32 %s16, 2
        // Predicated region
        $region90: #{tpu_custom_call.1} parent=88 // pred_check
          %p2311 = pneg %p163
        $region91: #{tpu_custom_call.1} parent=88 // pred_check_branch
          %2313 = sbr.rel (%p2311) target = $region93
        $region92: #{tpu_custom_call.1} parent=88 // pred_region
          %s2314 = sand.u32 %s148, 1
          %s2315 = scalar_lea.sflag [#allocation4], %s2314
          %s2316 = sand.u32 %s148, 1
          %s2317 = smul.addr %s2316, 512
          %s2318 = scalar_lea.vmem [#allocation6], %s2317
          %2319 = dma.done %s2315, 8192
        $region93: #{tpu_custom_call.1} parent=88 // pred_fallthru
          _
      $region89: #{tpu_custom_call.1} parent=5 // pred_fallthru
        _
    $region6: #{tpu_custom_call.1} parent=1 // loop_footer
      %s20 = sadd.s32 1, %s16
    $region7: #{tpu_custom_call.1} parent=1 // loop_footer_branch
      %15 = sbr.rel target = $region3
    $region8: #{tpu_custom_call.1} parent=1 // loop_exit
      _
    %2320 = vsyncpa [#allocation3], 1
    %s2321 = scalar_lea.sflag [#allocation3], 1
    %2322 = vsyncpa %s2321, 1
    %2323 = vsyncpa [#allocation4], 1
    %s2324 = scalar_lea.sflag [#allocation4], 1
    %2325 = vsyncpa %s2324, 1

</llo_original>
